<compile_context>
chip_gen: v7x
topology: tpu7x:2x2x1
jax: 0.10.0
libtpu: 0.0.40
codegen_flags: <defaults>
</compile_context>

<pallas_src>
import functools
import math
from typing import NamedTuple

import jax
import jax.numpy as jnp
from jax.experimental import pallas as pl
from jax.experimental.pallas import tpu as pltpu


class UNet2DOutput(NamedTuple):
    sample: jnp.ndarray


# ----------------------------- Pallas kernel -------------------------------

def _unet_block_kernel(
    x_ref,       # (1, C, T)   bf16  sample tokens, channels-second (lane dim = HW tile)
    k_ref,       # (1, S, D)   bf16  projected keys for this batch element
    vt_ref,      # (1, D, S)   bf16  projected values, pre-transposed
    win_t_ref,   # (D, C)      bf16  conv_in (1x1) weight, transposed
    wq_t_ref,    # (D, D)      bf16  Q projection, transposed
    wo_t_ref,    # (D, D)      bf16  attention output projection, transposed
    wout_t_ref,  # (C, D)      bf16  conv_out (1x1) weight, transposed
    btile_ref,   # (1, D, 1)   f32   per-batch conv_in bias column: bin + temb[b]
    bpack_ref,   # (R, 4)      f32   packed bias columns: [:D,0]=bq  [:D,1]=bo  [:C,2]=bout
    o_ref,       # (1, C, T)   sample dtype
):
    f32 = jnp.float32
    bf16 = jnp.bfloat16

    D = wq_t_ref.shape[0]
    C = wout_t_ref.shape[0]

    x = x_ref[0]                        # (C, T)
    k = k_ref[0]                        # (S, D)
    vt = vt_ref[0]                      # (D, S)
    bpack = bpack_ref[...]              # (R, 4)

    # conv_in (1x1 conv == channel matmul) + (bias + time embedding) + SiLU
    h = jnp.dot(win_t_ref[...], x, preferred_element_type=f32)               # (D, T)
    h = h + btile_ref[0]
    h = h * jax.nn.sigmoid(h)                                                # SiLU, f32

    # Q projection, channels-second
    q = jnp.dot(wq_t_ref[...], h.astype(bf16), preferred_element_type=f32)
    q = q + bpack[:D, 0:1]                                                   # (D, T)

    # scores (S, T): softmax over the small S axis (sublanes); lane dim stays dense
    s = jnp.dot(k, q.astype(bf16), preferred_element_type=f32)
    s = s * (1.0 / math.sqrt(D))
    s = s - jnp.max(s, axis=0, keepdims=True)
    p = jnp.exp(s)
    p = p * pl.reciprocal(jnp.sum(p, axis=0, keepdims=True), approx=True)

    # attention readout (D, T); V was pre-transposed outside the kernel (no XLU transpose here)
    attn = jnp.dot(vt, p.astype(bf16), preferred_element_type=f32)

    # attention output projection + residual
    h = h + jnp.dot(wo_t_ref[...], attn.astype(bf16), preferred_element_type=f32)
    h = h + bpack[:D, 1:2]

    # conv_out (1x1) back to the input channels
    out = jnp.dot(wout_t_ref[...], h.astype(bf16), preferred_element_type=f32)   # (C, T)
    out = out + bpack[:C, 2:3]
    o_ref[0] = out.astype(o_ref.dtype)


# ------------------------------ wrapper glue --------------------------------

def _sinusoidal_timestep_embedding(timesteps, dim):
    half = dim // 2
    freqs = jnp.exp(-math.log(10000.0) * jnp.arange(half, dtype=jnp.float32) / half)
    args = timesteps.astype(jnp.float32)[:, None] * freqs[None, :]
    return jnp.concatenate([jnp.sin(args), jnp.cos(args)], axis=-1)   # (B, dim)


def _pick_hw_tile(hw, target=512):
    # 512: multiple of 256 (v6e/v7x MXU width) and of 128 (v5e); small enough that the f32
    # (D, T) intermediates stay well under v7x's 64 MiB VMEM at production D (>=320).
    if hw <= target:
        return hw
    t = target
    while t >= 128:
        if hw % t == 0:
            return t
        t //= 2
    return hw   # irregular HW: fall back to a single tile


class OptimizedDiffusionWrapperPallas:
    """Pallas implementation of DiffusionUNetWrapper.forward (representative UNet block)."""

    def __init__(self, c_in=4, c_hid=32, enc_dim=32, key=None):
        assert enc_dim == c_hid, "cross-attn K/V projection expects enc_dim == c_hid"
        # TODO(synk): real text-conditioned UNets use enc_dim (768/1024) != c_hid; that needs a
        # rectangular K/V projection which this fused wkv does not express.
        self.c_in, self.c_hid = c_in, c_hid
        key = jax.random.PRNGKey(42) if key is None else key
        ks = jax.random.split(key, 20)

        def init(k, shape, scale):
            return jax.random.normal(k, shape, jnp.float32) * scale

        d = c_hid
        sd = 1.0 / math.sqrt(d)
        self.params = dict(
            wt1=init(ks[0], (d, d), sd),   bt1=init(ks[10], (1, d), 0.02),
            wt2=init(ks[1], (d, d), sd),   bt2=init(ks[11], (1, d), 0.02),
            win=init(ks[2], (c_in, d), 1.0 / math.sqrt(c_in)),
            bin=init(ks[12], (1, d), 0.02),
            wq=init(ks[3], (d, d), sd),    bq=init(ks[13], (1, d), 0.02),
            wk=init(ks[4], (d, d), sd),    bk=init(ks[14], (1, d), 0.02),
            wv=init(ks[5], (d, d), sd),    bv=init(ks[15], (1, d), 0.02),
            wo=init(ks[6], (d, d), sd),    bo=init(ks[16], (1, d), 0.02),
            wout=init(ks[7], (d, c_in), sd),
            bout=init(ks[17], (1, c_in), 0.02),
        )
        p = self.params
        bf16 = jnp.bfloat16
        # Kernel-side weights: transposed for the (feature, HW) layout, cast to bf16 once.
        self.k_win_t = p["win"].T.astype(bf16)                                  # (D, C)
        self.k_wq_t = p["wq"].T.astype(bf16)                                    # (D, D)
        self.k_wo_t = p["wo"].T.astype(bf16)                                    # (D, D)
        self.k_wout_t = p["wout"].T.astype(bf16)                                # (C, D)
        # K/V projection stays outside the kernel (hoisted: once per batch element).
        self.k_wkv = jnp.concatenate([p["wk"], p["wv"]], axis=1).astype(bf16)   # (D, 2D)
        self.k_bkv = jnp.concatenate([p["bk"], p["bv"]], axis=1)                # (1, 2D) f32
        # Constant bias columns packed into one f32 operand (one DMA instead of three).
        r = max(d, c_in)
        bpack = jnp.zeros((r, 4), jnp.float32)
        bpack = bpack.at[:d, 0].set(p["bq"][0])
        bpack = bpack.at[:d, 1].set(p["bo"][0])
        bpack = bpack.at[:c_in, 2].set(p["bout"][0])
        self.k_bpack = bpack

        self._fwd = {
            True: jax.jit(functools.partial(self._forward, single_buffer_weights=True)),
            False: jax.jit(functools.partial(self._forward, single_buffer_weights=False)),
        }
        self._single_buffer_ok = None

    # -- public API matching DiffusionUNetWrapper.forward(*x, **kwargs) -------
    def __call__(self, *x, **kwargs):
        sample, timestep = x[0], x[1]
        enc = x[2] if len(x) > 2 else kwargs["encoder_hidden_states"]
        if self._single_buffer_ok is None:
            # pl.Buffered(1) (single-buffered constant weights) is a recent Pallas feature;
            # fall back to default double-buffering if this jax/TPU combo rejects it.
            try:
                out = jax.block_until_ready(self._fwd[True](sample, timestep, enc))
                self._single_buffer_ok = True
            except Exception:
                self._single_buffer_ok = False
                out = self._fwd[False](sample, timestep, enc)
        else:
            out = self._fwd[self._single_buffer_ok](sample, timestep, enc)
        return UNet2DOutput(sample=out)

    # -- VMEM budget for the chosen tile ---------------------------------------
    @staticmethod
    def _vmem_limit_bytes(C, D, S, T, out_itemsize):
        bf, f = 2, 4
        R = max(D, C)
        xio = 2 * C * T * bf + 2 * C * T * out_itemsize              # x/out blocks, 2 buffers
        per_b = 2 * ((S * D + D * S) * bf + D * f)                   # k, v^T, bias col, 2 bufs
        consts = 2 * ((D * C + 2 * D * D + C * D) * bf + R * 4 * f)  # worst case double-buffered
        live = (5 * D * T + S * T + 2 * C * T) * f                   # in-flight f32 intermediates
        est = xio + per_b + consts + live
        # generous 2x headroom; floor 16 MiB, cap 64 MiB (safe on v5e/v6e/v7x physical VMEM)
        return int(min(max(2 * est, 16 << 20), 64 << 20))

    # -- forward (jit-wrapped) -------------------------------------------------
    def _forward(self, sample, timestep, enc, *, single_buffer_weights):
        f32, bf16 = jnp.float32, jnp.bfloat16
        B, C, H, W = sample.shape
        HW = H * W
        S = enc.shape[1]
        D = self.c_hid
        p = self.params

        # Per-sample timestep-embedding MLP, hoisted out of the kernel (1-row matmuls).
        ts = jnp.broadcast_to(jnp.reshape(timestep, (-1,)), (B,))
        t = _sinusoidal_timestep_embedding(ts, D)                               # (B, D)
        t = t @ p["wt1"] + p["bt1"]
        t = t * jax.nn.sigmoid(t)
        temb = t @ p["wt2"] + p["bt2"]                                          # (B, D)
        bin_col = (p["bin"] + temb)[:, :, None]                                 # (B, D, 1) f32

        # K/V projection hoisted out of the per-tile body: one (S, 2D) matmul per batch element
        # instead of HW/T recomputations, and no in-kernel V transpose.
        kv = jnp.dot(enc.astype(bf16), self.k_wkv,
                     preferred_element_type=f32) + self.k_bkv                   # (B, S, 2D)
        k_b = kv[..., :D].astype(bf16)                                          # (B, S, D)
        v_t = jnp.swapaxes(kv[..., D:], 1, 2).astype(bf16)                      # (B, D, S)

        # NCHW already has HW contiguous -> channels-second tokens via a pure reshape.
        x_cs = sample.reshape(B, C, HW).astype(bf16)                            # (B, C, HW)

        T = _pick_hw_tile(HW)                                                   # toy HW=256 -> 256
        n_t = HW // T
        R = self.k_bpack.shape[0]

        def const_spec(shape):
            # Constant-index weights/biases: single-buffer when supported (reclaims VMEM,
            # important on v7x); otherwise default Pallas double-buffering.
            idx = lambda b, t: (0,) * len(shape)
            if single_buffer_weights:
                return pl.BlockSpec(shape, idx, pipeline_mode=pl.Buffered(1))
            return pl.BlockSpec(shape, idx)

        out_cs = pl.pallas_call(
            _unet_block_kernel,
            out_shape=jax.ShapeDtypeStruct((B, C, HW), sample.dtype),
            grid_spec=pltpu.PrefetchScalarGridSpec(
                num_scalar_prefetch=0,
                grid=(B, n_t),                                        # HW tiles are the inner loop
                in_specs=[
                    pl.BlockSpec((1, C, T), lambda b, t: (b, 0, t)),  # x tokens (HW tile)
                    pl.BlockSpec((1, S, D), lambda b, t: (b, 0, 0)),  # k     (per batch element)
                    pl.BlockSpec((1, D, S), lambda b, t: (b, 0, 0)),  # v^T   (per batch element)
                    const_spec((D, C)),                               # win_t
                    const_spec((D, D)),                               # wq_t
                    const_spec((D, D)),                               # wo_t
                    const_spec((C, D)),                               # wout_t
                    pl.BlockSpec((1, D, 1), lambda b, t: (b, 0, 0)),  # bin + temb[b]
                    const_spec((R, 4)),                               # packed bias columns
                ],
                out_specs=pl.BlockSpec((1, C, T), lambda b, t: (b, 0, t)),
            ),
            compiler_params=pltpu.CompilerParams(
                dimension_semantics=("parallel", "parallel"),
                vmem_limit_bytes=self._vmem_limit_bytes(
                    C, D, S, T, jnp.dtype(sample.dtype).itemsize),
            ),
        )(
            x_cs, k_b, v_t,
            self.k_win_t, self.k_wq_t, self.k_wo_t, self.k_wout_t,
            bin_col, self.k_bpack,
        )

        return out_cs.reshape(B, C, H, W)   # no transpose needed

    # -- pure-JAX reference (same bf16-operand / f32-accumulate numerics) ------
    def _reference(self, sample, timestep, enc):
        f32, bf16 = jnp.float32, jnp.bfloat16
        p = self.params
        B, C, H, W = sample.shape
        D = self.c_hid

        def mm(a, b):
            return jnp.dot(a.astype(bf16), b.astype(bf16), preferred_element_type=f32)

        x = jnp.transpose(sample.astype(f32), (0, 2, 3, 1)).reshape(B, H * W, C)

        ts = jnp.broadcast_to(jnp.reshape(timestep, (-1,)), (B,))
        t = _sinusoidal_timestep_embedding(ts, D)
        t = t @ p["wt1"] + p["bt1"]
        t = t * jax.nn.sigmoid(t)
        temb = t @ p["wt2"] + p["bt2"]                                 # (B, D)

        h = mm(x, p["win"]) + p["bin"] + temb[:, None, :]
        h = h * jax.nn.sigmoid(h)

        wkv = jnp.concatenate([p["wk"], p["wv"]], axis=1)
        bkv = jnp.concatenate([p["bk"], p["bv"]], axis=1)
        kv = mm(enc, wkv) + bkv
        k, v = kv[..., :D], kv[..., D:]

        q = mm(h, p["wq"]) + p["bq"]
        s = jnp.einsum("bqd,bkd->bqk", q.astype(bf16), k.astype(bf16),
                       preferred_element_type=f32) / math.sqrt(D)
        s = s - jnp.max(s, axis=-1, keepdims=True)
        a = jnp.exp(s)
        a = a / jnp.sum(a, axis=-1, keepdims=True)
        attn = jnp.einsum("bqk,bkd->bqd", a.astype(bf16), v.astype(bf16),
                          preferred_element_type=f32)

        h = h + mm(attn, p["wo"]) + p["bo"]
        out = mm(h, p["wout"]) + p["bout"]
        return jnp.transpose(out.reshape(B, H, W, C), (0, 3, 1, 2))


if __name__ == "__main__":
    key = jax.random.PRNGKey(0)
    k1, k2, k3 = jax.random.split(key, 3)

    # NOTE: toy shapes — grid-step-overhead bound; not representative for perf conclusions.
    B, C, H, W = 2, 4, 16, 16
    S, D = 8, 32

    sample = jax.random.normal(k1, (B, C, H, W), jnp.float32)     # NCHW, like PyTorch
    timestep = jnp.asarray(10.0, jnp.float32)                     # 0-d scalar path
    encoder_hidden_states = jax.random.normal(k2, (B, S, D), jnp.float32)

    model = OptimizedDiffusionWrapperPallas(c_in=C, c_hid=D, enc_dim=D, key=k3)

    out = model(sample, timestep, encoder_hidden_states)          # positional, like the wrapper
    jax.block_until_ready(out.sample)

    ref = model._reference(sample, timestep, encoder_hidden_states)
    assert out.sample.shape == (B, C, H, W)
    assert out.sample.dtype == sample.dtype
    max_err = float(jnp.max(jnp.abs(out.sample - ref)))
    assert jnp.allclose(out.sample, ref, atol=2e-2, rtol=2e-2), f"max abs err {max_err}"

    print("KERNEL_OK")
</pallas_src>

<mosaic_0001>
module attributes {stable_mosaic.version = 11 : i64} {
  func.func @_unet_block_kernel(%arg0: i32, %arg1: i32, %arg2: memref<1x4x256xbf16, #tpu.memory_space<vmem>>, %arg3: memref<1x8x32xbf16, #tpu.memory_space<vmem>>, %arg4: memref<1x32x8xbf16, #tpu.memory_space<vmem>>, %arg5: memref<32x4xbf16, #tpu.memory_space<vmem>>, %arg6: memref<32x32xbf16, #tpu.memory_space<vmem>>, %arg7: memref<32x32xbf16, #tpu.memory_space<vmem>>, %arg8: memref<4x32xbf16, #tpu.memory_space<vmem>>, %arg9: memref<1x32x1xf32, #tpu.memory_space<vmem>>, %arg10: memref<32x4xf32, #tpu.memory_space<vmem>>, %arg11: memref<1x4x256xf32, #tpu.memory_space<vmem>>) attributes {dimension_semantics = [#tpu.dimension_semantics<parallel>, #tpu.dimension_semantics<parallel>], iteration_bounds = array<i64: 2, 1>, scalar_prefetch = 0 : i64, scratch_operands = 0 : i64, tpu.core_type = #tpu.core_type<tc>, window_params = [{transform_indices = @transform_0, window_bounds = array<i64: 1, 4, 256>}, {transform_indices = @transform_1, window_bounds = array<i64: 1, 8, 32>}, {transform_indices = @transform_2, window_bounds = array<i64: 1, 32, 8>}, {pipeline_mode = #tpu.pipeline_mode<synchronous>, transform_indices = @transform_3, window_bounds = array<i64: 32, 4>}, {pipeline_mode = #tpu.pipeline_mode<synchronous>, transform_indices = @transform_4, window_bounds = array<i64: 32, 32>}, {pipeline_mode = #tpu.pipeline_mode<synchronous>, transform_indices = @transform_5, window_bounds = array<i64: 32, 32>}, {pipeline_mode = #tpu.pipeline_mode<synchronous>, transform_indices = @transform_6, window_bounds = array<i64: 4, 32>}, {transform_indices = @transform_7, window_bounds = array<i64: 1, 32, 1>}, {pipeline_mode = #tpu.pipeline_mode<synchronous>, transform_indices = @transform_8, window_bounds = array<i64: 32, 4>}, {transform_indices = @transform_9, window_bounds = array<i64: 1, 4, 256>}]} {
    %c0 = arith.constant 0 : index
    %c0_0 = arith.constant 0 : index
    %c0_1 = arith.constant 0 : index
    %0 = vector.load %arg2[%c0, %c0_0, %c0_1] : memref<1x4x256xbf16, #tpu.memory_space<vmem>>, vector<1x4x256xbf16>
    %1 = vector.shape_cast %0 : vector<1x4x256xbf16> to vector<4x256xbf16>
    %c0_2 = arith.constant 0 : index
    %c0_3 = arith.constant 0 : index
    %c0_4 = arith.constant 0 : index
    %2 = vector.load %arg3[%c0_2, %c0_3, %c0_4] : memref<1x8x32xbf16, #tpu.memory_space<vmem>>, vector<1x8x32xbf16>
    %3 = vector.shape_cast %2 : vector<1x8x32xbf16> to vector<8x32xbf16>
    %c0_5 = arith.constant 0 : index
    %c0_6 = arith.constant 0 : index
    %c0_7 = arith.constant 0 : index
    %4 = vector.load %arg4[%c0_5, %c0_6, %c0_7] : memref<1x32x8xbf16, #tpu.memory_space<vmem>>, vector<1x32x8xbf16>
    %5 = vector.shape_cast %4 : vector<1x32x8xbf16> to vector<32x8xbf16>
    %c0_8 = arith.constant 0 : index
    %c0_9 = arith.constant 0 : index
    %6 = vector.load %arg10[%c0_8, %c0_9] : memref<32x4xf32, #tpu.memory_space<vmem>>, vector<32x4xf32>
    %c0_10 = arith.constant 0 : index
    %c0_11 = arith.constant 0 : index
    %7 = vector.load %arg5[%c0_10, %c0_11] : memref<32x4xbf16, #tpu.memory_space<vmem>>, vector<32x4xbf16>
    %cst = arith.constant dense<0.000000e+00> : vector<32x256xf32>
    %8 = tpu.matmul %7, %1, %cst {dimension_numbers = #tpu.dot_dimension_numbers<[1], [0], [0], [1], [0, 0, 1, 1], [], []>} : vector<32x4xbf16>, vector<4x256xbf16>, vector<32x256xf32> -> vector<32x256xf32>
    %c0_12 = arith.constant 0 : index
    %c0_13 = arith.constant 0 : index
    %c0_14 = arith.constant 0 : index
    %9 = vector.load %arg9[%c0_12, %c0_13, %c0_14] : memref<1x32x1xf32, #tpu.memory_space<vmem>>, vector<1x32x1xf32>
    %10 = vector.shape_cast %9 : vector<1x32x1xf32> to vector<32x1xf32>
    %11 = vector.broadcast %10 : vector<32x1xf32> to vector<32x256xf32>
    %12 = arith.addf %8, %11 : vector<32x256xf32>
    %13 = arith.negf %12 : vector<32x256xf32>
    %14 = math.exp %13 : vector<32x256xf32>
    %cst_15 = arith.constant 1.000000e+00 : f32
    %15 = vector.broadcast %cst_15 : f32 to vector<32x256xf32>
    %16 = arith.addf %15, %14 : vector<32x256xf32>
    %17 = arith.divf %15, %16 : vector<32x256xf32>
    %18 = arith.mulf %12, %17 : vector<32x256xf32>
    %c0_16 = arith.constant 0 : index
    %c0_17 = arith.constant 0 : index
    %19 = vector.load %arg6[%c0_16, %c0_17] : memref<32x32xbf16, #tpu.memory_space<vmem>>, vector<32x32xbf16>
    %20 = arith.truncf %18 : vector<32x256xf32> to vector<32x256xbf16>
    %cst_18 = arith.constant dense<0.000000e+00> : vector<32x256xf32>
    %21 = tpu.matmul %19, %20, %cst_18 {dimension_numbers = #tpu.dot_dimension_numbers<[1], [0], [0], [1], [0, 0, 1, 1], [], []>} : vector<32x32xbf16>, vector<32x256xbf16>, vector<32x256xf32> -> vector<32x256xf32>
    %22 = vector.extract_strided_slice %6 {offsets = [0, 0], sizes = [32, 1], strides = [1, 1]} : vector<32x4xf32> to vector<32x1xf32>
    %23 = vector.broadcast %22 : vector<32x1xf32> to vector<32x256xf32>
    %24 = arith.addf %21, %23 : vector<32x256xf32>
    %25 = arith.truncf %24 : vector<32x256xf32> to vector<32x256xbf16>
    %cst_19 = arith.constant dense<0.000000e+00> : vector<8x256xf32>
    %26 = tpu.matmul %3, %25, %cst_19 {dimension_numbers = #tpu.dot_dimension_numbers<[1], [0], [0], [1], [0, 0, 1, 1], [], []>} : vector<8x32xbf16>, vector<32x256xbf16>, vector<8x256xf32> -> vector<8x256xf32>
    %cst_20 = arith.constant 0.176776692 : f32
    %27 = vector.broadcast %cst_20 : f32 to vector<8x256xf32>
    %28 = arith.mulf %26, %27 : vector<8x256xf32>
    %cst_21 = arith.constant dense<0xFF800000> : vector<256xf32>
    %29 = vector.multi_reduction <maximumf>, %28, %cst_21 [0] : vector<8x256xf32> to vector<256xf32>
    %30 = vector.shape_cast %29 : vector<256xf32> to vector<1x256xf32>
    %31 = vector.broadcast %30 : vector<1x256xf32> to vector<8x256xf32>
    %32 = arith.subf %28, %31 : vector<8x256xf32>
    %33 = math.exp %32 : vector<8x256xf32>
    %cst_22 = arith.constant dense<0.000000e+00> : vector<256xf32>
    %34 = vector.multi_reduction <add>, %33, %cst_22 [0] : vector<8x256xf32> to vector<256xf32>
    %35 = vector.shape_cast %34 : vector<256xf32> to vector<1x256xf32>
    %36 = tpu.reciprocal %35 {approx = true} : vector<1x256xf32> -> vector<1x256xf32>
    %37 = vector.broadcast %36 : vector<1x256xf32> to vector<8x256xf32>
    %38 = arith.mulf %33, %37 : vector<8x256xf32>
    %39 = arith.truncf %38 : vector<8x256xf32> to vector<8x256xbf16>
    %cst_23 = arith.constant dense<0.000000e+00> : vector<32x256xf32>
    %40 = tpu.matmul %5, %39, %cst_23 {dimension_numbers = #tpu.dot_dimension_numbers<[1], [0], [0], [1], [0, 0, 1, 1], [], []>} : vector<32x8xbf16>, vector<8x256xbf16>, vector<32x256xf32> -> vector<32x256xf32>
    %c0_24 = arith.constant 0 : index
    %c0_25 = arith.constant 0 : index
    %41 = vector.load %arg7[%c0_24, %c0_25] : memref<32x32xbf16, #tpu.memory_space<vmem>>, vector<32x32xbf16>
    %42 = arith.truncf %40 : vector<32x256xf32> to vector<32x256xbf16>
    %cst_26 = arith.constant dense<0.000000e+00> : vector<32x256xf32>
    %43 = tpu.matmul %41, %42, %cst_26 {dimension_numbers = #tpu.dot_dimension_numbers<[1], [0], [0], [1], [0, 0, 1, 1], [], []>} : vector<32x32xbf16>, vector<32x256xbf16>, vector<32x256xf32> -> vector<32x256xf32>
    %44 = arith.addf %18, %43 : vector<32x256xf32>
    %45 = vector.extract_strided_slice %6 {offsets = [0, 1], sizes = [32, 1], strides = [1, 1]} : vector<32x4xf32> to vector<32x1xf32>
    %46 = vector.broadcast %45 : vector<32x1xf32> to vector<32x256xf32>
    %47 = arith.addf %44, %46 : vector<32x256xf32>
    %c0_27 = arith.constant 0 : index
    %c0_28 = arith.constant 0 : index
    %48 = vector.load %arg8[%c0_27, %c0_28] : memref<4x32xbf16, #tpu.memory_space<vmem>>, vector<4x32xbf16>
    %49 = arith.truncf %47 : vector<32x256xf32> to vector<32x256xbf16>
    %cst_29 = arith.constant dense<0.000000e+00> : vector<4x256xf32>
    %50 = tpu.matmul %48, %49, %cst_29 {dimension_numbers = #tpu.dot_dimension_numbers<[1], [0], [0], [1], [0, 0, 1, 1], [], []>} : vector<4x32xbf16>, vector<32x256xbf16>, vector<4x256xf32> -> vector<4x256xf32>
    %51 = vector.extract_strided_slice %6 {offsets = [0, 2], sizes = [4, 1], strides = [1, 1]} : vector<32x4xf32> to vector<4x1xf32>
    %52 = vector.broadcast %51 : vector<4x1xf32> to vector<4x256xf32>
    %53 = arith.addf %50, %52 : vector<4x256xf32>
    %c0_30 = arith.constant 0 : index
    %c0_31 = arith.constant 0 : index
    %c0_32 = arith.constant 0 : index
    %54 = vector.load %arg11[%c0_30, %c0_31, %c0_32] : memref<1x4x256xf32, #tpu.memory_space<vmem>>, vector<1x4x256xf32>
    %55 = vector.shape_cast %54 : vector<1x4x256xf32> to vector<4x256xf32>
    %56 = vector.shape_cast %53 : vector<4x256xf32> to vector<1x4x256xf32>
    tpu.vector_store %arg11[%c0_30, %c0_31, %c0_32], %56 {strides = array<i32>} : memref<1x4x256xf32, #tpu.memory_space<vmem>>, vector<1x4x256xf32>,
    return
  }
  func.func @transform_0(%arg0: i32, %arg1: i32) -> (i32, i32, i32) {
    %c0_i32 = arith.constant 0 : i32
    %c0_i32_0 = arith.constant 0 : i32
    return %arg0, %c0_i32, %arg1 : i32, i32, i32
  }
  func.func @transform_1(%arg0: i32, %arg1: i32) -> (i32, i32, i32) {
    %c0_i32 = arith.constant 0 : i32
    %c0_i32_0 = arith.constant 0 : i32
    %c0_i32_1 = arith.constant 0 : i32
    return %arg0, %c0_i32, %c0_i32_0 : i32, i32, i32
  }
  func.func @transform_2(%arg0: i32, %arg1: i32) -> (i32, i32, i32) {
    %c0_i32 = arith.constant 0 : i32
    %c0_i32_0 = arith.constant 0 : i32
    %c0_i32_1 = arith.constant 0 : i32
    return %arg0, %c0_i32, %c0_i32_0 : i32, i32, i32
  }
  func.func @transform_3(%arg0: i32, %arg1: i32) -> (i32, i32) {
    %c0_i32 = arith.constant 0 : i32
    %c0_i32_0 = arith.constant 0 : i32
    %c0_i32_1 = arith.constant 0 : i32
    return %c0_i32, %c0_i32_0 : i32, i32
  }
  func.func @transform_4(%arg0: i32, %arg1: i32) -> (i32, i32) {
    %c0_i32 = arith.constant 0 : i32
    %c0_i32_0 = arith.constant 0 : i32
    %c0_i32_1 = arith.constant 0 : i32
    return %c0_i32, %c0_i32_0 : i32, i32
  }
  func.func @transform_5(%arg0: i32, %arg1: i32) -> (i32, i32) {
    %c0_i32 = arith.constant 0 : i32
    %c0_i32_0 = arith.constant 0 : i32
    %c0_i32_1 = arith.constant 0 : i32
    return %c0_i32, %c0_i32_0 : i32, i32
  }
  func.func @transform_6(%arg0: i32, %arg1: i32) -> (i32, i32) {
    %c0_i32 = arith.constant 0 : i32
    %c0_i32_0 = arith.constant 0 : i32
    %c0_i32_1 = arith.constant 0 : i32
    return %c0_i32, %c0_i32_0 : i32, i32
  }
  func.func @transform_7(%arg0: i32, %arg1: i32) -> (i32, i32, i32) {
    %c0_i32 = arith.constant 0 : i32
    %c0_i32_0 = arith.constant 0 : i32
    %c0_i32_1 = arith.constant 0 : i32
    return %arg0, %c0_i32, %c0_i32_0 : i32, i32, i32
  }
  func.func @transform_8(%arg0: i32, %arg1: i32) -> (i32, i32) {
    %c0_i32 = arith.constant 0 : i32
    %c0_i32_0 = arith.constant 0 : i32
    %c0_i32_1 = arith.constant 0 : i32
    return %c0_i32, %c0_i32_0 : i32, i32
  }
  func.func @transform_9(%arg0: i32, %arg1: i32) -> (i32, i32, i32) {
    %c0_i32 = arith.constant 0 : i32
    %c0_i32_0 = arith.constant 0 : i32
    return %arg0, %c0_i32, %arg1 : i32, i32, i32
  }
}

module attributes {stable_mosaic.version = 11 : i64} {
  func.func @_unet_block_kernel(%arg0: i32, %arg1: i32, %arg2: memref<1x4x256xbf16, #tpu.memory_space<vmem>>, %arg3: memref<1x8x32xbf16, #tpu.memory_space<vmem>>, %arg4: memref<1x32x8xbf16, #tpu.memory_space<vmem>>, %arg5: memref<32x4xbf16, #tpu.memory_space<vmem>>, %arg6: memref<32x32xbf16, #tpu.memory_space<vmem>>, %arg7: memref<32x32xbf16, #tpu.memory_space<vmem>>, %arg8: memref<4x32xbf16, #tpu.memory_space<vmem>>, %arg9: memref<1x32x1xf32, #tpu.memory_space<vmem>>, %arg10: memref<32x4xf32, #tpu.memory_space<vmem>>, %arg11: memref<1x4x256xf32, #tpu.memory_space<vmem>>) attributes {dimension_semantics = [#tpu.dimension_semantics<parallel>, #tpu.dimension_semantics<parallel>], iteration_bounds = array<i64: 2, 1>, scalar_prefetch = 0 : i64, scratch_operands = 0 : i64, tpu.core_type = #tpu.core_type<tc>, window_params = [{transform_indices = @transform_0, window_bounds = array<i64: 1, 4, 256>}, {transform_indices = @transform_1, window_bounds = array<i64: 1, 8, 32>}, {transform_indices = @transform_2, window_bounds = array<i64: 1, 32, 8>}, {pipeline_mode = #tpu.pipeline_mode<synchronous>, transform_indices = @transform_3, window_bounds = array<i64: 32, 4>}, {pipeline_mode = #tpu.pipeline_mode<synchronous>, transform_indices = @transform_4, window_bounds = array<i64: 32, 32>}, {pipeline_mode = #tpu.pipeline_mode<synchronous>, transform_indices = @transform_5, window_bounds = array<i64: 32, 32>}, {pipeline_mode = #tpu.pipeline_mode<synchronous>, transform_indices = @transform_6, window_bounds = array<i64: 4, 32>}, {transform_indices = @transform_7, window_bounds = array<i64: 1, 32, 1>}, {pipeline_mode = #tpu.pipeline_mode<synchronous>, transform_indices = @transform_8, window_bounds = array<i64: 32, 4>}, {transform_indices = @transform_9, window_bounds = array<i64: 1, 4, 256>}]} {
    %c0 = arith.constant 0 : index
    %c0_0 = arith.constant 0 : index
    %c0_1 = arith.constant 0 : index
    %0 = vector.load %arg2[%c0, %c0_0, %c0_1] : memref<1x4x256xbf16, #tpu.memory_space<vmem>>, vector<1x4x256xbf16>
    %1 = vector.shape_cast %0 : vector<1x4x256xbf16> to vector<4x256xbf16>
    %c0_2 = arith.constant 0 : index
    %c0_3 = arith.constant 0 : index
    %c0_4 = arith.constant 0 : index
    %2 = vector.load %arg3[%c0_2, %c0_3, %c0_4] : memref<1x8x32xbf16, #tpu.memory_space<vmem>>, vector<1x8x32xbf16>
    %3 = vector.shape_cast %2 : vector<1x8x32xbf16> to vector<8x32xbf16>
    %c0_5 = arith.constant 0 : index
    %c0_6 = arith.constant 0 : index
    %c0_7 = arith.constant 0 : index
    %4 = vector.load %arg4[%c0_5, %c0_6, %c0_7] : memref<1x32x8xbf16, #tpu.memory_space<vmem>>, vector<1x32x8xbf16>
    %5 = vector.shape_cast %4 : vector<1x32x8xbf16> to vector<32x8xbf16>
    %c0_8 = arith.constant 0 : index
    %c0_9 = arith.constant 0 : index
    %6 = vector.load %arg10[%c0_8, %c0_9] : memref<32x4xf32, #tpu.memory_space<vmem>>, vector<32x4xf32>
    %c0_10 = arith.constant 0 : index
    %c0_11 = arith.constant 0 : index
    %7 = vector.load %arg5[%c0_10, %c0_11] : memref<32x4xbf16, #tpu.memory_space<vmem>>, vector<32x4xbf16>
    %cst = arith.constant dense<0.000000e+00> : vector<32x256xf32>
    %8 = tpu.matmul %7, %1, %cst {dimension_numbers = #tpu.dot_dimension_numbers<[1], [0], [0], [1], [0, 0, 1, 1], [], []>} : vector<32x4xbf16>, vector<4x256xbf16>, vector<32x256xf32> -> vector<32x256xf32>
    %c0_12 = arith.constant 0 : index
    %c0_13 = arith.constant 0 : index
    %c0_14 = arith.constant 0 : index
    %9 = vector.load %arg9[%c0_12, %c0_13, %c0_14] : memref<1x32x1xf32, #tpu.memory_space<vmem>>, vector<1x32x1xf32>
    %10 = vector.shape_cast %9 : vector<1x32x1xf32> to vector<32x1xf32>
    %11 = vector.broadcast %10 : vector<32x1xf32> to vector<32x256xf32>
    %12 = arith.addf %8, %11 : vector<32x256xf32>
    %13 = arith.negf %12 : vector<32x256xf32>
    %14 = math.exp %13 : vector<32x256xf32>
    %cst_15 = arith.constant 1.000000e+00 : f32
    %15 = vector.broadcast %cst_15 : f32 to vector<32x256xf32>
    %16 = arith.addf %15, %14 : vector<32x256xf32>
    %17 = arith.divf %15, %16 : vector<32x256xf32>
    %18 = arith.mulf %12, %17 : vector<32x256xf32>
    %c0_16 = arith.constant 0 : index
    %c0_17 = arith.constant 0 : index
    %19 = vector.load %arg6[%c0_16, %c0_17] : memref<32x32xbf16, #tpu.memory_space<vmem>>, vector<32x32xbf16>
    %20 = arith.truncf %18 : vector<32x256xf32> to vector<32x256xbf16>
    %cst_18 = arith.constant dense<0.000000e+00> : vector<32x256xf32>
    %21 = tpu.matmul %19, %20, %cst_18 {dimension_numbers = #tpu.dot_dimension_numbers<[1], [0], [0], [1], [0, 0, 1, 1], [], []>} : vector<32x32xbf16>, vector<32x256xbf16>, vector<32x256xf32> -> vector<32x256xf32>
    %22 = vector.extract_strided_slice %6 {offsets = [0, 0], sizes = [32, 1], strides = [1, 1]} : vector<32x4xf32> to vector<32x1xf32>
    %23 = vector.broadcast %22 : vector<32x1xf32> to vector<32x256xf32>
    %24 = arith.addf %21, %23 : vector<32x256xf32>
    %25 = arith.truncf %24 : vector<32x256xf32> to vector<32x256xbf16>
    %cst_19 = arith.constant dense<0.000000e+00> : vector<8x256xf32>
    %26 = tpu.matmul %3, %25, %cst_19 {dimension_numbers = #tpu.dot_dimension_numbers<[1], [0], [0], [1], [0, 0, 1, 1], [], []>} : vector<8x32xbf16>, vector<32x256xbf16>, vector<8x256xf32> -> vector<8x256xf32>
    %cst_20 = arith.constant 0.176776692 : f32
    %27 = vector.broadcast %cst_20 : f32 to vector<8x256xf32>
    %28 = arith.mulf %26, %27 : vector<8x256xf32>
    %cst_21 = arith.constant dense<0xFF800000> : vector<256xf32>
    %29 = vector.multi_reduction <maximumf>, %28, %cst_21 [0] : vector<8x256xf32> to vector<256xf32>
    %30 = vector.shape_cast %29 : vector<256xf32> to vector<1x256xf32>
    %31 = vector.broadcast %30 : vector<1x256xf32> to vector<8x256xf32>
    %32 = arith.subf %28, %31 : vector<8x256xf32>
    %33 = math.exp %32 : vector<8x256xf32>
    %cst_22 = arith.constant dense<0.000000e+00> : vector<256xf32>
    %34 = vector.multi_reduction <add>, %33, %cst_22 [0] : vector<8x256xf32> to vector<256xf32>
    %35 = vector.shape_cast %34 : vector<256xf32> to vector<1x256xf32>
    %36 = tpu.reciprocal %35 {approx = true} : vector<1x256xf32> -> vector<1x256xf32>
    %37 = vector.broadcast %36 : vector<1x256xf32> to vector<8x256xf32>
    %38 = arith.mulf %33, %37 : vector<8x256xf32>
    %39 = arith.truncf %38 : vector<8x256xf32> to vector<8x256xbf16>
    %cst_23 = arith.constant dense<0.000000e+00> : vector<32x256xf32>
    %40 = tpu.matmul %5, %39, %cst_23 {dimension_numbers = #tpu.dot_dimension_numbers<[1], [0], [0], [1], [0, 0, 1, 1], [], []>} : vector<32x8xbf16>, vector<8x256xbf16>, vector<32x256xf32> -> vector<32x256xf32>
    %c0_24 = arith.constant 0 : index
    %c0_25 = arith.constant 0 : index
    %41 = vector.load %arg7[%c0_24, %c0_25] : memref<32x32xbf16, #tpu.memory_space<vmem>>, vector<32x32xbf16>
    %42 = arith.truncf %40 : vector<32x256xf32> to vector<32x256xbf16>
    %cst_26 = arith.constant dense<0.000000e+00> : vector<32x256xf32>
    %43 = tpu.matmul %41, %42, %cst_26 {dimension_numbers = #tpu.dot_dimension_numbers<[1], [0], [0], [1], [0, 0, 1, 1], [], []>} : vector<32x32xbf16>, vector<32x256xbf16>, vector<32x256xf32> -> vector<32x256xf32>
    %44 = arith.addf %18, %43 : vector<32x256xf32>
    %45 = vector.extract_strided_slice %6 {offsets = [0, 1], sizes = [32, 1], strides = [1, 1]} : vector<32x4xf32> to vector<32x1xf32>
    %46 = vector.broadcast %45 : vector<32x1xf32> to vector<32x256xf32>
    %47 = arith.addf %44, %46 : vector<32x256xf32>
    %c0_27 = arith.constant 0 : index
    %c0_28 = arith.constant 0 : index
    %48 = vector.load %arg8[%c0_27, %c0_28] : memref<4x32xbf16, #tpu.memory_space<vmem>>, vector<4x32xbf16>
    %49 = arith.truncf %47 : vector<32x256xf32> to vector<32x256xbf16>
    %cst_29 = arith.constant dense<0.000000e+00> : vector<4x256xf32>
    %50 = tpu.matmul %48, %49, %cst_29 {dimension_numbers = #tpu.dot_dimension_numbers<[1], [0], [0], [1], [0, 0, 1, 1], [], []>} : vector<4x32xbf16>, vector<32x256xbf16>, vector<4x256xf32> -> vector<4x256xf32>
    %51 = vector.extract_strided_slice %6 {offsets = [0, 2], sizes = [4, 1], strides = [1, 1]} : vector<32x4xf32> to vector<4x1xf32>
    %52 = vector.broadcast %51 : vector<4x1xf32> to vector<4x256xf32>
    %53 = arith.addf %50, %52 : vector<4x256xf32>
    %c0_30 = arith.constant 0 : index
    %c0_31 = arith.constant 0 : index
    %c0_32 = arith.constant 0 : index
    %54 = vector.load %arg11[%c0_30, %c0_31, %c0_32] : memref<1x4x256xf32, #tpu.memory_space<vmem>>, vector<1x4x256xf32>
    %55 = vector.shape_cast %54 : vector<1x4x256xf32> to vector<4x256xf32>
    %56 = vector.shape_cast %53 : vector<4x256xf32> to vector<1x4x256xf32>
    tpu.vector_store %arg11[%c0_30, %c0_31, %c0_32], %56 {strides = array<i32>} : memref<1x4x256xf32, #tpu.memory_space<vmem>>, vector<1x4x256xf32>,
    return
  }
  func.func @transform_0(%arg0: i32, %arg1: i32) -> (i32, i32, i32) {
    %c0_i32 = arith.constant 0 : i32
    %c0_i32_0 = arith.constant 0 : i32
    return %arg0, %c0_i32, %arg1 : i32, i32, i32
  }
  func.func @transform_1(%arg0: i32, %arg1: i32) -> (i32, i32, i32) {
    %c0_i32 = arith.constant 0 : i32
    %c0_i32_0 = arith.constant 0 : i32
    %c0_i32_1 = arith.constant 0 : i32
    return %arg0, %c0_i32, %c0_i32_0 : i32, i32, i32
  }
  func.func @transform_2(%arg0: i32, %arg1: i32) -> (i32, i32, i32) {
    %c0_i32 = arith.constant 0 : i32
    %c0_i32_0 = arith.constant 0 : i32
    %c0_i32_1 = arith.constant 0 : i32
    return %arg0, %c0_i32, %c0_i32_0 : i32, i32, i32
  }
  func.func @transform_3(%arg0: i32, %arg1: i32) -> (i32, i32) {
    %c0_i32 = arith.constant 0 : i32
    %c0_i32_0 = arith.constant 0 : i32
    %c0_i32_1 = arith.constant 0 : i32
    return %c0_i32, %c0_i32_0 : i32, i32
  }
  func.func @transform_4(%arg0: i32, %arg1: i32) -> (i32, i32) {
    %c0_i32 = arith.constant 0 : i32
    %c0_i32_0 = arith.constant 0 : i32
    %c0_i32_1 = arith.constant 0 : i32
    return %c0_i32, %c0_i32_0 : i32, i32
  }
  func.func @transform_5(%arg0: i32, %arg1: i32) -> (i32, i32) {
    %c0_i32 = arith.constant 0 : i32
    %c0_i32_0 = arith.constant 0 : i32
    %c0_i32_1 = arith.constant 0 : i32
    return %c0_i32, %c0_i32_0 : i32, i32
  }
  func.func @transform_6(%arg0: i32, %arg1: i32) -> (i32, i32) {
    %c0_i32 = arith.constant 0 : i32
    %c0_i32_0 = arith.constant 0 : i32
    %c0_i32_1 = arith.constant 0 : i32
    return %c0_i32, %c0_i32_0 : i32, i32
  }
  func.func @transform_7(%arg0: i32, %arg1: i32) -> (i32, i32, i32) {
    %c0_i32 = arith.constant 0 : i32
    %c0_i32_0 = arith.constant 0 : i32
    %c0_i32_1 = arith.constant 0 : i32
    return %arg0, %c0_i32, %c0_i32_0 : i32, i32, i32
  }
  func.func @transform_8(%arg0: i32, %arg1: i32) -> (i32, i32) {
    %c0_i32 = arith.constant 0 : i32
    %c0_i32_0 = arith.constant 0 : i32
    %c0_i32_1 = arith.constant 0 : i32
    return %c0_i32, %c0_i32_0 : i32, i32
  }
  func.func @transform_9(%arg0: i32, %arg1: i32) -> (i32, i32, i32) {
    %c0_i32 = arith.constant 0 : i32
    %c0_i32_0 = arith.constant 0 : i32
    return %arg0, %c0_i32, %arg1 : i32, i32, i32
  }
}

</mosaic_0001>

<llo_original>
// kernel: _forward.1
$region0: #{_forward.1}
  #allocation0 [shape = 'u32[]', space=smem, size = 0x4, offset = 0x4, fixed_abs, tag = 'smem constant byte address 0x4 - core index']
  #allocation1 [shape = 'u32[144,128]{1,0:T(1,128)}', space=vmem, size = 0x12000, scoped, tag = 'internal scratch']
  %s0 = inlined_call_operand.vmem [shape: bf16[2,4,256], index: 0, kind: input, shape index: {}]
  %s1 = inlined_call_operand.vmem [shape: bf16[2,8,32], index: 1, kind: input, shape index: {}]
  %s2 = inlined_call_operand.vmem [shape: bf16[2,32,8], index: 2, kind: input, shape index: {}]
  %s3 = inlined_call_operand.vmem [shape: bf16[32,4], index: 3, kind: input, shape index: {}]
  %s4 = inlined_call_operand.vmem [shape: bf16[32,32], index: 4, kind: input, shape index: {}]
  %s5 = inlined_call_operand.vmem [shape: bf16[32,32], index: 5, kind: input, shape index: {}]
  %s6 = inlined_call_operand.vmem [shape: bf16[4,32], index: 6, kind: input, shape index: {}]
  %s7 = inlined_call_operand.vmem [shape: f32[2,32,1], index: 7, kind: input, shape index: {}]
  %s8 = inlined_call_operand.vmem [shape: f32[32,4], index: 8, kind: input, shape index: {}]
  %s9 = inlined_call_operand.vmem [shape: f32[2,4,256], index: 9, kind: output, shape index: {}]
  %s10 = sld [smem:[#allocation0]]
  $region69: #{_forward.1} parent=0
    _
  %s12 = ssub.s32 1, %s10
  %s13 = scalar_select 0, %s12, %s10
  loop: start=0, step=1, limit=4
  $region2: #{_forward.1} parent=0 // loop_pre_header
    _
  $region3: #{_forward.1} parent=0 // loop_header
    %s15 = sphi 0, %s19
    %p16 = scmp.ge.s32.totalorder %s15, 4
    %s22 = sphi 0, %s34
    %s23 = sphi 0, %s30
    %s24 = sphi 0, %s22
    %s25 = sphi 0, %s23
    %s26 = sphi 0, %s24
    %s27 = sphi 0, %s25
    %s39 = sphi 0, %s41
    %s42 = sphi 0, %s39
    %s43 = sphi 0, %s42
    %s59 = sphi 0, %s43
    %s65 = sphi 0, %s67
    %s68 = sphi 0, %s65
    %s69 = sphi 0, %s68
    %s85 = sphi 0, %s69
    %s91 = sphi 0, %s93
    %s94 = sphi 0, %s91
    %s95 = sphi 0, %s94
    %s111 = sphi 0, %s95
    %s115 = sphi 0, %s115
    %s117 = sphi 0, %s115
    %s118 = sphi 0, %s117
    %s132 = sphi 0, %s118
    %s136 = sphi 0, %s136
    %s138 = sphi 0, %s136
    %s139 = sphi 0, %s138
    %s153 = sphi 0, %s139
    %s157 = sphi 0, %s157
    %s159 = sphi 0, %s157
    %s160 = sphi 0, %s159
    %s174 = sphi 0, %s160
    %s178 = sphi 0, %s178
    %s180 = sphi 0, %s178
    %s181 = sphi 0, %s180
    %s195 = sphi 0, %s181
    %s201 = sphi 0, %s203
    %s204 = sphi 0, %s201
    %s205 = sphi 0, %s204
    %s221 = sphi 0, %s205
    %s225 = sphi 0, %s225
    %s227 = sphi 0, %s225
    %s228 = sphi 0, %s227
    %s242 = sphi 0, %s228
    %s250 = sphi 0, %s252
    %s253 = sphi 0, %s250
    %s254 = sphi 0, %s253
    %s270 = sphi 0, %s254
  $region4: #{_forward.1} parent=0 // loop_header_branch
    %18 = sbr.rel (%p16) target = $region8
  $region5: #{_forward.1} parent=0 // loop_body
    %s20 = ssub.s32 %s15, 1
    %s21 = ssub.s32 %s15, 2
    %s28 = sadd.s32 1, %s23
    %p29 = scmp.ge.s32.totalorder %s28, 1
    %s30 = scalar_select %p29, 0, %s28
    %s31 = sadd.s32 1, %s22
    %s32 = scalar_select %p29, %s31, %s22
    %p33 = scmp.ge.s32.totalorder %s32, 2
    %s34 = scalar_select %p33, 0, %s32
    %s35 = ssub.s32 %s22, %s34
    %s36 = ssub.s32 %s23, %s30
    %s37 = sor.u32 %s35, %s36
    %p38 = scmp.eq.s32.totalorder %s37, 0
    %s40 = sadd.s32 %s39, 1
    %s41 = scalar_select %p38, %s39, %s40
    %p44 = pneg %p38
    %p45 = scmp.eq.s32.totalorder %s15, 1
    %p46 = por %p44, %p45
    %p47 = scmp.ne.s32.totalorder %s39, %s42
    %p48 = scmp.eq.s32.totalorder %s15, 0
    %p49 = por %p47, %p48
    %p50 = scmp.ne.s32.totalorder %s39, %s42
    %p51 = scmp.eq.s32.totalorder %s20, 1
    %p52 = por %p50, %p51
    %p53 = scmp.ne.s32.totalorder %s42, %s43
    %p54 = scmp.eq.s32.totalorder %s20, 0
    %p55 = por %p53, %p54
    %p56 = scmp.ne.s32.totalorder %s42, %s43
    %p57 = scmp.eq.s32.totalorder %s21, 1
    %p58 = por %p56, %p57
    %p60 = scmp.ne.s32.totalorder %s43, %s59
    %p61 = scmp.eq.s32.totalorder %s21, 0
    %p62 = por %p60, %p61
    %s63 = ssub.s32 %s22, %s34
    %p64 = scmp.eq.s32.totalorder %s63, 0
    %s66 = sadd.s32 %s65, 1
    %s67 = scalar_select %p64, %s65, %s66
    %p70 = pneg %p64
    %p71 = scmp.eq.s32.totalorder %s15, 1
    %p72 = por %p70, %p71
    %p73 = scmp.ne.s32.totalorder %s65, %s68
    %p74 = scmp.eq.s32.totalorder %s15, 0
    %p75 = por %p73, %p74
    %p76 = scmp.ne.s32.totalorder %s65, %s68
    %p77 = scmp.eq.s32.totalorder %s20, 1
    %p78 = por %p76, %p77
    %p79 = scmp.ne.s32.totalorder %s68, %s69
    %p80 = scmp.eq.s32.totalorder %s20, 0
    %p81 = por %p79, %p80
    %p82 = scmp.ne.s32.totalorder %s68, %s69
    %p83 = scmp.eq.s32.totalorder %s21, 1
    %p84 = por %p82, %p83
    %p86 = scmp.ne.s32.totalorder %s69, %s85
    %p87 = scmp.eq.s32.totalorder %s21, 0
    %p88 = por %p86, %p87
    %s89 = ssub.s32 %s22, %s34
    %p90 = scmp.eq.s32.totalorder %s89, 0
    %s92 = sadd.s32 %s91, 1
    %s93 = scalar_select %p90, %s91, %s92
    %p96 = pneg %p90
    %p97 = scmp.eq.s32.totalorder %s15, 1
    %p98 = por %p96, %p97
    %p99 = scmp.ne.s32.totalorder %s91, %s94
    %p100 = scmp.eq.s32.totalorder %s15, 0
    %p101 = por %p99, %p100
    %p102 = scmp.ne.s32.totalorder %s91, %s94
    %p103 = scmp.eq.s32.totalorder %s20, 1
    %p104 = por %p102, %p103
    %p105 = scmp.ne.s32.totalorder %s94, %s95
    %p106 = scmp.eq.s32.totalorder %s20, 0
    %p107 = por %p105, %p106
    %p108 = scmp.ne.s32.totalorder %s94, %s95
    %p109 = scmp.eq.s32.totalorder %s21, 1
    %p110 = por %p108, %p109
    %p112 = scmp.ne.s32.totalorder %s95, %s111
    %p113 = scmp.eq.s32.totalorder %s21, 0
    %p114 = por %p112, %p113
    %s116 = sadd.s32 %s115, 1
    %p119 = scmp.eq.s32.totalorder %s15, 1
    %p120 = scmp.ne.s32.totalorder %s115, %s117
    %p121 = scmp.eq.s32.totalorder %s15, 0
    %p122 = por %p120, %p121
    %p123 = scmp.ne.s32.totalorder %s115, %s117
    %p124 = scmp.eq.s32.totalorder %s20, 1
    %p125 = por %p123, %p124
    %p126 = scmp.ne.s32.totalorder %s117, %s118
    %p127 = scmp.eq.s32.totalorder %s20, 0
    %p128 = por %p126, %p127
    %p129 = scmp.ne.s32.totalorder %s117, %s118
    %p130 = scmp.eq.s32.totalorder %s21, 1
    %p131 = por %p129, %p130
    %p133 = scmp.ne.s32.totalorder %s118, %s132
    %p134 = scmp.eq.s32.totalorder %s21, 0
    %p135 = por %p133, %p134
    %s137 = sadd.s32 %s136, 1
    %p140 = scmp.eq.s32.totalorder %s15, 1
    %p141 = scmp.ne.s32.totalorder %s136, %s138
    %p142 = scmp.eq.s32.totalorder %s15, 0
    %p143 = por %p141, %p142
    %p144 = scmp.ne.s32.totalorder %s136, %s138
    %p145 = scmp.eq.s32.totalorder %s20, 1
    %p146 = por %p144, %p145
    %p147 = scmp.ne.s32.totalorder %s138, %s139
    %p148 = scmp.eq.s32.totalorder %s20, 0
    %p149 = por %p147, %p148
    %p150 = scmp.ne.s32.totalorder %s138, %s139
    %p151 = scmp.eq.s32.totalorder %s21, 1
    %p152 = por %p150, %p151
    %p154 = scmp.ne.s32.totalorder %s139, %s153
    %p155 = scmp.eq.s32.totalorder %s21, 0
    %p156 = por %p154, %p155
    %s158 = sadd.s32 %s157, 1
    %p161 = scmp.eq.s32.totalorder %s15, 1
    %p162 = scmp.ne.s32.totalorder %s157, %s159
    %p163 = scmp.eq.s32.totalorder %s15, 0
    %p164 = por %p162, %p163
    %p165 = scmp.ne.s32.totalorder %s157, %s159
    %p166 = scmp.eq.s32.totalorder %s20, 1
    %p167 = por %p165, %p166
    %p168 = scmp.ne.s32.totalorder %s159, %s160
    %p169 = scmp.eq.s32.totalorder %s20, 0
    %p170 = por %p168, %p169
    %p171 = scmp.ne.s32.totalorder %s159, %s160
    %p172 = scmp.eq.s32.totalorder %s21, 1
    %p173 = por %p171, %p172
    %p175 = scmp.ne.s32.totalorder %s160, %s174
    %p176 = scmp.eq.s32.totalorder %s21, 0
    %p177 = por %p175, %p176
    %s179 = sadd.s32 %s178, 1
    %p182 = scmp.eq.s32.totalorder %s15, 1
    %p183 = scmp.ne.s32.totalorder %s178, %s180
    %p184 = scmp.eq.s32.totalorder %s15, 0
    %p185 = por %p183, %p184
    %p186 = scmp.ne.s32.totalorder %s178, %s180
    %p187 = scmp.eq.s32.totalorder %s20, 1
    %p188 = por %p186, %p187
    %p189 = scmp.ne.s32.totalorder %s180, %s181
    %p190 = scmp.eq.s32.totalorder %s20, 0
    %p191 = por %p189, %p190
    %p192 = scmp.ne.s32.totalorder %s180, %s181
    %p193 = scmp.eq.s32.totalorder %s21, 1
    %p194 = por %p192, %p193
    %p196 = scmp.ne.s32.totalorder %s181, %s195
    %p197 = scmp.eq.s32.totalorder %s21, 0
    %p198 = por %p196, %p197
    %s199 = ssub.s32 %s22, %s34
    %p200 = scmp.eq.s32.totalorder %s199, 0
    %s202 = sadd.s32 %s201, 1
    %s203 = scalar_select %p200, %s201, %s202
    %p206 = pneg %p200
    %p207 = scmp.eq.s32.totalorder %s15, 1
    %p208 = por %p206, %p207
    %p209 = scmp.ne.s32.totalorder %s201, %s204
    %p210 = scmp.eq.s32.totalorder %s15, 0
    %p211 = por %p209, %p210
    %p212 = scmp.ne.s32.totalorder %s201, %s204
    %p213 = scmp.eq.s32.totalorder %s20, 1
    %p214 = por %p212, %p213
    %p215 = scmp.ne.s32.totalorder %s204, %s205
    %p216 = scmp.eq.s32.totalorder %s20, 0
    %p217 = por %p215, %p216
    %p218 = scmp.ne.s32.totalorder %s204, %s205
    %p219 = scmp.eq.s32.totalorder %s21, 1
    %p220 = por %p218, %p219
    %p222 = scmp.ne.s32.totalorder %s205, %s221
    %p223 = scmp.eq.s32.totalorder %s21, 0
    %p224 = por %p222, %p223
    %s226 = sadd.s32 %s225, 1
    %p229 = scmp.eq.s32.totalorder %s15, 1
    %p230 = scmp.ne.s32.totalorder %s225, %s227
    %p231 = scmp.eq.s32.totalorder %s15, 0
    %p232 = por %p230, %p231
    %p233 = scmp.ne.s32.totalorder %s225, %s227
    %p234 = scmp.eq.s32.totalorder %s20, 1
    %p235 = por %p233, %p234
    %p236 = scmp.ne.s32.totalorder %s227, %s228
    %p237 = scmp.eq.s32.totalorder %s20, 0
    %p238 = por %p236, %p237
    %p239 = scmp.ne.s32.totalorder %s227, %s228
    %p240 = scmp.eq.s32.totalorder %s21, 1
    %p241 = por %p239, %p240
    %p243 = scmp.ne.s32.totalorder %s228, %s242
    %p244 = scmp.eq.s32.totalorder %s21, 0
    %p245 = por %p243, %p244
    %s246 = ssub.s32 %s22, %s34
    %s247 = ssub.s32 %s23, %s30
    %s248 = sor.u32 %s246, %s247
    %p249 = scmp.eq.s32.totalorder %s248, 0
    %s251 = sadd.s32 %s250, 1
    %s252 = scalar_select %p249, %s250, %s251
    %p255 = pneg %p249
    %p256 = scmp.eq.s32.totalorder %s15, 1
    %p257 = por %p255, %p256
    %p258 = scmp.ne.s32.totalorder %s250, %s253
    %p259 = scmp.eq.s32.totalorder %s15, 0
    %p260 = por %p258, %p259
    %p261 = scmp.ne.s32.totalorder %s250, %s253
    %p262 = scmp.eq.s32.totalorder %s20, 1
    %p263 = por %p261, %p262
    %p264 = scmp.ne.s32.totalorder %s253, %s254
    %p265 = scmp.eq.s32.totalorder %s20, 0
    %p266 = por %p264, %p265
    %p267 = scmp.ne.s32.totalorder %s253, %s254
    %p268 = scmp.eq.s32.totalorder %s21, 1
    %p269 = por %p267, %p268
    %p271 = scmp.ne.s32.totalorder %s254, %s270
    %p272 = scmp.eq.s32.totalorder %s21, 0
    %p273 = por %p271, %p272
    %p274 = scmp.le.s32.totalorder 1, %s15
    %p275 = scmp.lt.s32.totalorder %s15, 3
    %p276 = pnand %p274, %p275
    %p277 = pneg %p276
    // Predicated region
    $region9: #{_forward.1} parent=5 // pred_check
      _
    $region10: #{_forward.1} parent=5 // pred_check_branch
      %279 = sbr.rel (%p276) target = $region12
    $region11: #{_forward.1} parent=5 // pred_region
      %s280 = ssub.s32 %s15, 1
      // Predicated region
      $region13: #{_forward.1} parent=11 // pred_check
        %p281 = pneg %p128
      $region14: #{_forward.1} parent=11 // pred_check_branch
        %283 = sbr.rel (%p281) target = $region16
      $region15: #{_forward.1} parent=11 // pred_region
        _
      $region16: #{_forward.1} parent=11 // pred_fallthru
        _
      // Predicated region
      $region17: #{_forward.1} parent=11 // pred_check
        %p284 = pneg %p149
      $region18: #{_forward.1} parent=11 // pred_check_branch
        %286 = sbr.rel (%p284) target = $region20
      $region19: #{_forward.1} parent=11 // pred_region
        _
      $region20: #{_forward.1} parent=11 // pred_fallthru
        _
      // Predicated region
      $region21: #{_forward.1} parent=11 // pred_check
        %p287 = pneg %p170
      $region22: #{_forward.1} parent=11 // pred_check_branch
        %289 = sbr.rel (%p287) target = $region24
      $region23: #{_forward.1} parent=11 // pred_region
        _
      $region24: #{_forward.1} parent=11 // pred_fallthru
        _
      // Predicated region
      $region25: #{_forward.1} parent=11 // pred_check
        %p290 = pneg %p191
      $region26: #{_forward.1} parent=11 // pred_check_branch
        %292 = sbr.rel (%p290) target = $region28
      $region27: #{_forward.1} parent=11 // pred_region
        _
      $region28: #{_forward.1} parent=11 // pred_fallthru
        _
      // Predicated region
      $region29: #{_forward.1} parent=11 // pred_check
        %p293 = pneg %p238
      $region30: #{_forward.1} parent=11 // pred_check_branch
        %295 = sbr.rel (%p293) target = $region32
      $region31: #{_forward.1} parent=11 // pred_region
        _
      $region32: #{_forward.1} parent=11 // pred_fallthru
        _
    $region12: #{_forward.1} parent=5 // pred_fallthru
      _
    %p296 = scmp.lt.s32.totalorder %s15, 2
    // Predicated region
    $region33: #{_forward.1} parent=5 // pred_check
      %p297 = pneg %p296
    $region34: #{_forward.1} parent=5 // pred_check_branch
      %299 = sbr.rel (%p297) target = $region36
    $region35: #{_forward.1} parent=5 // pred_region
      // Predicated region
      $region37: #{_forward.1} parent=35 // pred_check
        %p300 = pneg %p49
      $region38: #{_forward.1} parent=35 // pred_check_branch
        %302 = sbr.rel (%p300) target = $region40
      $region39: #{_forward.1} parent=35 // pred_region
        %s303 = smul.u32 2, %s23
        %p304 = scmp.lt.s32.totalorder %s22, 1
        %s305 = scalar_select %p304, %s22, 1
        %p306 = scmp.lt.s32.totalorder %s303, 1
        %s307 = scalar_select %p306, %s303, 1
        %s308 = smul.addr %s305, 2
        %s309 = sadd.s32 %s307, %s308
        %s310 = smul.addr %s309, 2
        %s311 = scalar_lea.vmem %s0, %s310
        %s312 = smul.u32 2, %s23
      $region40: #{_forward.1} parent=35 // pred_fallthru
        _
      // Predicated region
      $region41: #{_forward.1} parent=35 // pred_check
        %p313 = pneg %p75
      $region42: #{_forward.1} parent=35 // pred_check_branch
        %315 = sbr.rel (%p313) target = $region44
      $region43: #{_forward.1} parent=35 // pred_region
        %p316 = scmp.lt.s32.totalorder %s22, 1
        %s317 = scalar_select %p316, %s22, 1
        %s318 = smul.addr %s317, 4
        %s319 = scalar_lea.vmem %s1, %s318
      $region44: #{_forward.1} parent=35 // pred_fallthru
        _
      // Predicated region
      $region45: #{_forward.1} parent=35 // pred_check
        %p320 = pneg %p101
      $region46: #{_forward.1} parent=35 // pred_check_branch
        %322 = sbr.rel (%p320) target = $region48
      $region47: #{_forward.1} parent=35 // pred_region
        %p323 = scmp.lt.s32.totalorder %s22, 1
        %s324 = scalar_select %p323, %s22, 1
        %s325 = smul.addr %s324, 4
        %s326 = smul.addr %s325, 4
        %s327 = scalar_lea.vmem %s2, %s326
      $region48: #{_forward.1} parent=35 // pred_fallthru
        _
      // Predicated region
      $region49: #{_forward.1} parent=35 // pred_check
        %p328 = pneg %p211
      $region50: #{_forward.1} parent=35 // pred_check_branch
        %330 = sbr.rel (%p328) target = $region52
      $region51: #{_forward.1} parent=35 // pred_region
        %p331 = scmp.lt.s32.totalorder %s22, 1
        %s332 = scalar_select %p331, %s22, 1
        %s333 = smul.addr %s332, 4
        %s334 = smul.addr %s333, 8
        %s335 = scalar_lea.vmem %s7, %s334
      $region52: #{_forward.1} parent=35 // pred_fallthru
        _
    $region36: #{_forward.1} parent=5 // pred_fallthru
      _
    %p336 = scmp.le.s32.totalorder 1, %s15
    %p337 = scmp.lt.s32.totalorder %s15, 3
    %p338 = pnand %p336, %p337
    %p339 = pneg %p338
    // Predicated region
    $region53: #{_forward.1} parent=5 // pred_check
      _
    $region54: #{_forward.1} parent=5 // pred_check_branch
      %341 = sbr.rel (%p338) target = $region56
    $region55: #{_forward.1} parent=5 // pred_region
      %s342 = ssub.s32 %s15, 1
      %s343 = smul.u32 2, %s25
      %p344 = scmp.lt.s32.totalorder %s24, 1
      %s345 = scalar_select %p344, %s24, 1
      %p346 = scmp.lt.s32.totalorder %s343, 1
      %s347 = scalar_select %p346, %s343, 1
      %s348 = smul.addr %s345, 2
      %s349 = sadd.s32 %s347, %s348
      %s350 = smul.addr %s349, 2
      %s351 = scalar_lea.vmem %s0, %s350
      %p352 = pneg %p55
      %p353 = pneg %p52
      %p354 = scmp.lt.s32.totalorder %s24, 1
      %s355 = scalar_select %p354, %s24, 1
      %s356 = smul.addr %s355, 4
      %s357 = scalar_lea.vmem %s1, %s356
      %p358 = pneg %p81
      %p359 = pneg %p78
      %p360 = scmp.lt.s32.totalorder %s24, 1
      %s361 = scalar_select %p360, %s24, 1
      %s362 = smul.addr %s361, 4
      %s363 = smul.addr %s362, 4
      %s364 = scalar_lea.vmem %s2, %s363
      %p365 = pneg %p107
      %p366 = pneg %p104
      %p367 = pneg %p128
      %p368 = pneg %p125
      %p369 = pneg %p149
      %p370 = pneg %p146
      %p371 = pneg %p170
      %p372 = pneg %p167
      %p373 = pneg %p191
      %p374 = pneg %p188
      %p375 = scmp.lt.s32.totalorder %s24, 1
      %s376 = scalar_select %p375, %s24, 1
      %s377 = smul.addr %s376, 4
      %s378 = smul.addr %s377, 8
      %s379 = scalar_lea.vmem %s7, %s378
      %p380 = pneg %p217
      %p381 = pneg %p214
      %p382 = pneg %p238
      %p383 = pneg %p235
      %p384 = pneg %p266
      %p385 = pneg %p263
      %s386 = smul.u32 2, %s25
      %p387 = scmp.lt.s32.totalorder %s24, 1
      %s388 = scalar_select %p387, %s24, 1
      %p389 = scmp.lt.s32.totalorder %s386, 1
      %s390 = scalar_select %p389, %s386, 1
      %s391 = smul.addr %s388, 2
      %s392 = sadd.s32 %s390, %s391
      %s393 = smul.addr %s392, 4
      %s394 = scalar_lea.vmem %s9, %s393
      %s395 = smul.u32 2, %s25
      %p396 = scmp.lt.s32.totalorder %s24, 1
      %s397 = scalar_select %p396, %s24, 1
      %p398 = scmp.lt.s32.totalorder %s395, 1
      %s399 = scalar_select %p398, %s395, 1
      %s400 = smul.addr %s397, 2
      %s401 = sadd.s32 %s399, %s400
      %s402 = smul.addr %s401, 2
      %s403 = scalar_lea.vmem %s0, %s402
      %s404 = smul.u32 2, %s25
      %p405 = scmp.lt.s32.totalorder %s24, 1
      %s406 = scalar_select %p405, %s24, 1
      %s407 = smul.addr %s406, 4
      %s408 = scalar_lea.vmem %s1, %s407
      %p409 = scmp.lt.s32.totalorder %s24, 1
      %s410 = scalar_select %p409, %s24, 1
      %s411 = smul.addr %s410, 4
      %s412 = smul.addr %s411, 4
      %s413 = scalar_lea.vmem %s2, %s412
      %p414 = scmp.lt.s32.totalorder %s24, 1
      %s415 = scalar_select %p414, %s24, 1
      %s416 = smul.addr %s415, 4
      %s417 = smul.addr %s416, 8
      %s418 = scalar_lea.vmem %s7, %s417
      %s419 = smul.u32 2, %s25
      %p420 = scmp.lt.s32.totalorder %s24, 1
      %s421 = scalar_select %p420, %s24, 1
      %p422 = scmp.lt.s32.totalorder %s419, 1
      %s423 = scalar_select %p422, %s419, 1
      %s424 = smul.addr %s421, 2
      %s425 = sadd.s32 %s423, %s424
      %s426 = smul.addr %s425, 4
      %s427 = scalar_lea.vmem %s9, %s426
      %s428 = smul.u32 2, %s25
      %v430 = vld [vmem:[%s403] sm:$0xf]
      %v431 = vld [vmem:[%s408] sm:$0xf]
      %v432 = vld [vmem:[%s413] sm:$0xf]
      %v433 = vld [vmem:[%s413 + $0x4] sm:$0xf]
      %v434 = vld [vmem:[%s413 + $0x8] sm:$0xf]
      %v435 = vld [vmem:[%s413 + $0xc] sm:$0xf]
      %v436 = vld [vmem:[%s8] sm:$0xff]
      %v437 = vld [vmem:[%s8 + $0x8] sm:$0xff]
      %v438 = vld [vmem:[%s8 + $0x10] sm:$0xff]
      %v439 = vld [vmem:[%s8 + $0x18] sm:$0xff]
      %v440 = vld [vmem:[%s3] sm:$0xf]
      %v441 = vld [vmem:[%s3 + $0x4] sm:$0xf]
      %v442 = vld [vmem:[%s3 + $0x8] sm:$0xf]
      %v443 = vld [vmem:[%s3 + $0xc] sm:$0xf]
      %v444 = vld [vmem:[%s418] sm:$0xff]
      %v445 = vld [vmem:[%s418 + $0x8] sm:$0xff]
      %v446 = vld [vmem:[%s418 + $0x10] sm:$0xff]
      %v447 = vld [vmem:[%s418 + $0x18] sm:$0xff]
      %449 = vset.pattern.permute.xlu0 0
      %450 = vperm.xlu0 %449, %v444
      %v451 = vpop.permute.xlu0 %450
      %454 = vset.pattern.permute.xlu0 0
      %455 = vperm.xlu0 %454, %v445
      %v456 = vpop.permute.xlu0 %455
      %459 = vset.pattern.permute.xlu0 0
      %460 = vperm.xlu0 %459, %v446
      %v461 = vpop.permute.xlu0 %460
      %464 = vset.pattern.permute.xlu0 0
      %465 = vperm.xlu0 %464, %v447
      %v466 = vpop.permute.xlu0 %465
      %v472 = vunpack.c.l.b16 %v440
      %v473 = vunpack.c.l.b16 %v441
      %v474 = vunpack.c.l.b16 %v442
      %v475 = vunpack.c.l.b16 %v443
      %v476 = vpack.c.b16 %v473, %v472
      %v477 = vpack.c.b16 %v475, %v474
      %v480 = vunpack.c.l.s4 1983009808
      %v481 = vunpack.c.0.s8 %v480
      %v482 = vlaneseq
      %v483 = vshrl.u32 %v482, 7
      %v484 = vsub.s32 %v481, %v483
      %v485 = vrot.slane %v430, %v484
      %v486 = vcombine.high %v485, %v485
      %vm487 = vcmask 31744
      %v489 = vsel %vm487, %v476, 0
      %v492 = vsel %vm487, %v477, 0
      %vm494 = vcmask 1041408
      %v496 = vsel %vm494, %v485, 0
      %v499 = vsel %vm494, %v486, 0
      %501 = vmatprep.subr.bf16.mxu0 %v499
      %502 = vmatpush1.bf16.msra.mxu0 %v496
      %503 = vmatprep.subr.bf16.mxu0 0
      %504 = vmatpush1.bf16.msra.mxu0 0
      %505 = vmatprep.subr.bf16.mxu0 0
      %506 = vmatpush1.bf16.msra.mxu0 0
      %507 = vmatprep.subr.bf16.mxu0 0
      %508 = vmatpush1.bf16.msra.mxu0 0
      %509 = vmatprep.subr.bf16.mxu0 0
      %510 = vmatpush1.bf16.msra.mxu0 0
      %511 = vmatprep.subr.bf16.mxu0 0
      %512 = vmatpush1.bf16.msra.mxu0 0
      %513 = vmatprep.subr.bf16.mxu0 0
      %514 = vmatpush1.bf16.msra.mxu0 0
      %515 = vmatprep.subr.bf16.mxu0 0
      %516 = vmatpush1.bf16.msra.mxu0 0
      %517 = vmatprep.subr.bf16.mxu0 0
      %518 = vmatpush1.bf16.msra.mxu0 0
      %519 = vmatprep.subr.bf16.mxu0 0
      %520 = vmatpush1.bf16.msra.mxu0 0
      %521 = vmatprep.subr.bf16.mxu0 0
      %522 = vmatpush1.bf16.msra.mxu0 0
      %523 = vmatprep.subr.bf16.mxu0 0
      %524 = vmatpush1.bf16.msra.mxu0 0
      %525 = vmatprep.subr.bf16.mxu0 0
      %526 = vmatpush1.bf16.msra.mxu0 0
      %527 = vmatprep.subr.bf16.mxu0 0
      %528 = vmatpush1.bf16.msra.mxu0 0
      %529 = vmatprep.subr.bf16.mxu0 0
      %530 = vmatpush1.bf16.msra.mxu0 0
      %531 = vmatprep.subr.bf16.mxu0 0
      %532 = vmatpush1.bf16.msra.mxu0 0
      %533 = vmatprep.mubr.bf16.mxu0 0
      %534 = vmatmul.mubr.bf16.gmra.mrb[0].mxu0 %v489
      %v535 = vpop.f32.mrb[0].mxu0
      %v536 = vadd.f32 %v451, %v535
      %v537 = vpop.f32.mrb[0].mxu0
      %v538 = vadd.f32 %v451, %v537
      %v539 = vpop.f32.mrb[0].mxu0
      %v540 = vadd.f32 %v456, %v539
      %v541 = vpop.f32.mrb[0].mxu0
      %v542 = vadd.f32 %v456, %v541
      %543 = vmatprep.mubr.bf16.mxu0 0
      %544 = vmatmul.mubr.bf16.gmra.mrb[0].mxu0 %v492
      %v545 = vpop.f32.mrb[0].mxu0
      %v546 = vadd.f32 %v461, %v545
      %v547 = vpop.f32.mrb[0].mxu0
      %v548 = vadd.f32 %v461, %v547
      %v549 = vpop.f32.mrb[0].mxu0
      %v550 = vadd.f32 %v466, %v549
      %v551 = vpop.f32.mrb[0].mxu0
      %v552 = vadd.f32 %v466, %v551
      %553 = vdwg.mxu0
      %v554 = vxor.u32 %v536, 2147483648
      %v555 = vxor.u32 %v538, 2147483648
      %v556 = vxor.u32 %v540, 2147483648
      %v557 = vxor.u32 %v542, 2147483648
      %v558 = vxor.u32 %v546, 2147483648
      %v559 = vxor.u32 %v548, 2147483648
      %v560 = vxor.u32 %v550, 2147483648
      %v561 = vxor.u32 %v552, 2147483648
      %v562 = vmul.f32 %v554, 1.442695
      %v563 = vpow.pop %v562
      %v564 = vmul.f32 %v555, 1.442695
      %v565 = vpow.pop %v564
      %v566 = vmul.f32 %v556, 1.442695
      %v567 = vpow.pop %v566
      %v568 = vmul.f32 %v557, 1.442695
      %v569 = vpow.pop %v568
      %v570 = vmul.f32 %v558, 1.442695
      %v571 = vpow.pop %v570
      %v572 = vmul.f32 %v559, 1.442695
      %v573 = vpow.pop %v572
      %v574 = vmul.f32 %v560, 1.442695
      %v575 = vpow.pop %v574
      %v576 = vmul.f32 %v561, 1.442695
      %v577 = vpow.pop %v576
      %v578 = vadd.f32 %v563, 1.0
      %v579 = vadd.f32 %v565, 1.0
      %v580 = vadd.f32 %v567, 1.0
      %v581 = vadd.f32 %v569, 1.0
      %v582 = vadd.f32 %v571, 1.0
      %v583 = vadd.f32 %v573, 1.0
      %v584 = vadd.f32 %v575, 1.0
      %v585 = vadd.f32 %v577, 1.0
      %v586 = vrcp.pop %v578
      %v587 = vmul.f32 1.0, %v586
      %v588 = vrcp.pop %v579
      %v589 = vmul.f32 1.0, %v588
      %v590 = vrcp.pop %v580
      %v591 = vmul.f32 1.0, %v590
      %v592 = vrcp.pop %v581
      %v593 = vmul.f32 1.0, %v592
      %v594 = vrcp.pop %v582
      %v595 = vmul.f32 1.0, %v594
      %v596 = vrcp.pop %v583
      %v597 = vmul.f32 1.0, %v596
      %v598 = vrcp.pop %v584
      %v599 = vmul.f32 1.0, %v598
      %v600 = vrcp.pop %v585
      %v601 = vmul.f32 1.0, %v600
      %v602 = vmul.f32 %v536, %v587
      %v603 = vmul.f32 %v538, %v589
      %v604 = vmul.f32 %v540, %v591
      %v605 = vmul.f32 %v542, %v593
      %v606 = vmul.f32 %v546, %v595
      %v607 = vmul.f32 %v548, %v597
      %v608 = vmul.f32 %v550, %v599
      %v609 = vmul.f32 %v552, %v601
      %v610 = vld [vmem:[%s4] sm:$0xf]
      %v611 = vld [vmem:[%s4 + $0x4] sm:$0xf]
      %v612 = vld [vmem:[%s4 + $0x8] sm:$0xf]
      %v613 = vld [vmem:[%s4 + $0xc] sm:$0xf]
      %v614 = vpack.c.bf16 %v604, %v602
      %v615 = vpack.c.bf16 %v605, %v603
      %v616 = vpack.c.bf16 %v608, %v606
      %v617 = vpack.c.bf16 %v609, %v607
      %619 = vset.pattern.permute.xlu0 0
      %620 = vperm.xlu0 %619, %v436
      %v621 = vpop.permute.xlu0 %620
      %624 = vset.pattern.permute.xlu0 0
      %625 = vperm.xlu0 %624, %v437
      %v626 = vpop.permute.xlu0 %625
      %629 = vset.pattern.permute.xlu0 0
      %630 = vperm.xlu0 %629, %v438
      %v631 = vpop.permute.xlu0 %630
      %634 = vset.pattern.permute.xlu0 0
      %635 = vperm.xlu0 %634, %v439
      %v636 = vpop.permute.xlu0 %635
      %v642 = vunpack.c.l.b16 %v610
      %v643 = vunpack.c.l.b16 %v611
      %v644 = vunpack.c.l.b16 %v612
      %v645 = vunpack.c.l.b16 %v613
      %v646 = vpack.c.b16 %v643, %v642
      %v647 = vpack.c.b16 %v645, %v644
      %vm648 = vcmask 261120
      %v650 = vsel %vm648, %v646, 0
      %v653 = vsel %vm648, %v647, 0
      %655 = vmatprep.subr.bf16.mxu0 %v615
      %656 = vmatpush1.bf16.msra.mxu0 %v614
      %657 = vmatprep.subr.bf16.mxu0 %v617
      %658 = vmatpush1.bf16.msra.mxu0 %v616
      %659 = vmatprep.subr.bf16.mxu0 0
      %660 = vmatpush1.bf16.msra.mxu0 0
      %661 = vmatprep.subr.bf16.mxu0 0
      %662 = vmatpush1.bf16.msra.mxu0 0
      %663 = vmatprep.subr.bf16.mxu0 0
      %664 = vmatpush1.bf16.msra.mxu0 0
      %665 = vmatprep.subr.bf16.mxu0 0
      %666 = vmatpush1.bf16.msra.mxu0 0
      %667 = vmatprep.subr.bf16.mxu0 0
      %668 = vmatpush1.bf16.msra.mxu0 0
      %669 = vmatprep.subr.bf16.mxu0 0
      %670 = vmatpush1.bf16.msra.mxu0 0
      %671 = vmatprep.subr.bf16.mxu0 0
      %672 = vmatpush1.bf16.msra.mxu0 0
      %673 = vmatprep.subr.bf16.mxu0 0
      %674 = vmatpush1.bf16.msra.mxu0 0
      %675 = vmatprep.subr.bf16.mxu0 0
      %676 = vmatpush1.bf16.msra.mxu0 0
      %677 = vmatprep.subr.bf16.mxu0 0
      %678 = vmatpush1.bf16.msra.mxu0 0
      %679 = vmatprep.subr.bf16.mxu0 0
      %680 = vmatpush1.bf16.msra.mxu0 0
      %681 = vmatprep.subr.bf16.mxu0 0
      %682 = vmatpush1.bf16.msra.mxu0 0
      %683 = vmatprep.subr.bf16.mxu0 0
      %684 = vmatpush1.bf16.msra.mxu0 0
      %685 = vmatprep.subr.bf16.mxu0 0
      %686 = vmatpush1.bf16.msra.mxu0 0
      %687 = vmatprep.mubr.bf16.mxu0 0
      %688 = vmatmul.mubr.bf16.gmra.mrb[0].mxu0 %v650
      %v689 = vpop.f32.mrb[0].mxu0
      %v690 = vadd.f32 %v621, %v689
      %v691 = vpop.f32.mrb[0].mxu0
      %v692 = vadd.f32 %v621, %v691
      %v693 = vpop.f32.mrb[0].mxu0
      %v694 = vadd.f32 %v626, %v693
      %v695 = vpop.f32.mrb[0].mxu0
      %v696 = vadd.f32 %v626, %v695
      %697 = vmatprep.mubr.bf16.mxu0 0
      %698 = vmatmul.mubr.bf16.gmra.mrb[0].mxu0 %v653
      %v699 = vpop.f32.mrb[0].mxu0
      %v700 = vadd.f32 %v631, %v699
      %v701 = vpop.f32.mrb[0].mxu0
      %v702 = vadd.f32 %v631, %v701
      %v703 = vpop.f32.mrb[0].mxu0
      %v704 = vadd.f32 %v636, %v703
      %v705 = vpop.f32.mrb[0].mxu0
      %v706 = vadd.f32 %v636, %v705
      %707 = vdwg.mxu0
      %v708 = vpack.c.bf16 %v694, %v690
      %v709 = vpack.c.bf16 %v696, %v692
      %v710 = vpack.c.bf16 %v704, %v700
      %v711 = vpack.c.bf16 %v706, %v702
      %v713 = vsel %vm648, %v431, 0
      %715 = vmatprep.subr.bf16.mxu0 %v709
      %716 = vmatpush1.bf16.msra.mxu0 %v708
      %717 = vmatprep.subr.bf16.mxu0 %v711
      %718 = vmatpush1.bf16.msra.mxu0 %v710
      %719 = vmatprep.subr.bf16.mxu0 0
      %720 = vmatpush1.bf16.msra.mxu0 0
      %721 = vmatprep.subr.bf16.mxu0 0
      %722 = vmatpush1.bf16.msra.mxu0 0
      %723 = vmatprep.subr.bf16.mxu0 0
      %724 = vmatpush1.bf16.msra.mxu0 0
      %725 = vmatprep.subr.bf16.mxu0 0
      %726 = vmatpush1.bf16.msra.mxu0 0
      %727 = vmatprep.subr.bf16.mxu0 0
      %728 = vmatpush1.bf16.msra.mxu0 0
      %729 = vmatprep.subr.bf16.mxu0 0
      %730 = vmatpush1.bf16.msra.mxu0 0
      %731 = vmatprep.subr.bf16.mxu0 0
      %732 = vmatpush1.bf16.msra.mxu0 0
      %733 = vmatprep.subr.bf16.mxu0 0
      %734 = vmatpush1.bf16.msra.mxu0 0
      %735 = vmatprep.subr.bf16.mxu0 0
      %736 = vmatpush1.bf16.msra.mxu0 0
      %737 = vmatprep.subr.bf16.mxu0 0
      %738 = vmatpush1.bf16.msra.mxu0 0
      %739 = vmatprep.subr.bf16.mxu0 0
      %740 = vmatpush1.bf16.msra.mxu0 0
      %741 = vmatprep.subr.bf16.mxu0 0
      %742 = vmatpush1.bf16.msra.mxu0 0
      %743 = vmatprep.subr.bf16.mxu0 0
      %744 = vmatpush1.bf16.msra.mxu0 0
      %745 = vmatprep.subr.bf16.mxu0 0
      %746 = vmatpush1.bf16.msra.mxu0 0
      %747 = vmatprep.mubr.bf16.mxu0 0
      %748 = vmatmul.mubr.bf16.gmra.mrb[0].mxu0 %v713
      %v749 = vpop.f32.mrb[0].mxu0
      %v750 = vadd.f32 0.0, %v749
      %v751 = vpop.f32.mrb[0].mxu0
      %v752 = vadd.f32 0.0, %v751
      %v753 = vpop.f32.mrb[0].mxu0
      %v754 = vpop.f32.mrb[0].mxu0
      %755 = vdwg.mxu0
      %v756 = vmul.f32 %v750, 0.17677669
      %v757 = vmul.f32 %v752, 0.17677669
      %v758 = vrot.slane %v756, 4
      %v759 = vmax.f32 %v756, %v758
      %v760 = vrot.slane %v759, 2
      %v761 = vmax.f32 %v759, %v760
      %v762 = vrot.slane %v761, 1
      %v763 = vmax.f32 %v761, %v762
      %v764 = vrot.slane %v757, 4
      %v765 = vmax.f32 %v757, %v764
      %v766 = vrot.slane %v765, 2
      %v767 = vmax.f32 %v765, %v766
      %v768 = vrot.slane %v767, 1
      %v769 = vmax.f32 %v767, %v768
      %v770 = vsub.f32 %v756, %v763
      %v771 = vsub.f32 %v757, %v769
      %v772 = vmul.f32 %v770, 1.442695
      %v773 = vpow.pop %v772
      %v774 = vmul.f32 %v771, 1.442695
      %v775 = vpow.pop %v774
      %v776 = vrot.slane %v773, 4
      %v777 = vadd.f32 %v773, %v776
      %v778 = vrot.slane %v777, 2
      %v779 = vadd.f32 %v777, %v778
      %v780 = vrot.slane %v779, 1
      %v781 = vadd.f32 %v779, %v780
      %v782 = vrot.slane %v775, 4
      %v783 = vadd.f32 %v775, %v782
      %v784 = vrot.slane %v783, 2
      %v785 = vadd.f32 %v783, %v784
      %v786 = vrot.slane %v785, 1
      %v787 = vadd.f32 %v785, %v786
      %v788 = vrcp.pop %v781
      %v789 = vrcp.pop %v787
      %v790 = vmul.f32 %v773, %v788
      %v791 = vmul.f32 %v775, %v789
      %v792 = vpack.c.bf16 %v790, %v790
      %v793 = vpack.c.bf16 %v791, %v791
      %v798 = vunpack.c.l.b16 %v432
      %v799 = vunpack.c.l.b16 %v433
      %v800 = vunpack.c.l.b16 %v434
      %v801 = vunpack.c.l.b16 %v435
      %v802 = vpack.c.b16 %v799, %v798
      %v803 = vpack.c.b16 %v801, %v800
      %vm804 = vcmask 64512
      %v806 = vsel %vm804, %v802, 0
      %v809 = vsel %vm804, %v803, 0
      %vm811 = vcmask 1043456
      %v813 = vsel %vm811, %v792, 0
      %v816 = vsel %vm811, %v793, 0
      %818 = vmatprep.subr.bf16.mxu0 %v816
      %819 = vmatpush1.bf16.msra.mxu0 %v813
      %820 = vmatprep.subr.bf16.mxu0 0
      %821 = vmatpush1.bf16.msra.mxu0 0
      %822 = vmatprep.subr.bf16.mxu0 0
      %823 = vmatpush1.bf16.msra.mxu0 0
      %824 = vmatprep.subr.bf16.mxu0 0
      %825 = vmatpush1.bf16.msra.mxu0 0
      %826 = vmatprep.subr.bf16.mxu0 0
      %827 = vmatpush1.bf16.msra.mxu0 0
      %828 = vmatprep.subr.bf16.mxu0 0
      %829 = vmatpush1.bf16.msra.mxu0 0
      %830 = vmatprep.subr.bf16.mxu0 0
      %831 = vmatpush1.bf16.msra.mxu0 0
      %832 = vmatprep.subr.bf16.mxu0 0
      %833 = vmatpush1.bf16.msra.mxu0 0
      %834 = vmatprep.subr.bf16.mxu0 0
      %835 = vmatpush1.bf16.msra.mxu0 0
      %836 = vmatprep.subr.bf16.mxu0 0
      %837 = vmatpush1.bf16.msra.mxu0 0
      %838 = vmatprep.subr.bf16.mxu0 0
      %839 = vmatpush1.bf16.msra.mxu0 0
      %840 = vmatprep.subr.bf16.mxu0 0
      %841 = vmatpush1.bf16.msra.mxu0 0
      %842 = vmatprep.subr.bf16.mxu0 0
      %843 = vmatpush1.bf16.msra.mxu0 0
      %844 = vmatprep.subr.bf16.mxu0 0
      %845 = vmatpush1.bf16.msra.mxu0 0
      %846 = vmatprep.subr.bf16.mxu0 0
      %847 = vmatpush1.bf16.msra.mxu0 0
      %848 = vmatprep.subr.bf16.mxu0 0
      %849 = vmatpush1.bf16.msra.mxu0 0
      %850 = vmatprep.mubr.bf16.mxu0 0
      %851 = vmatmul.mubr.bf16.gmra.mrb[0].mxu0 %v806
      %v852 = vpop.f32.mrb[0].mxu0
      %v853 = vadd.f32 0.0, %v852
      %v854 = vpop.f32.mrb[0].mxu0
      %v855 = vadd.f32 0.0, %v854
      %v856 = vpop.f32.mrb[0].mxu0
      %v857 = vadd.f32 0.0, %v856
      %v858 = vpop.f32.mrb[0].mxu0
      %v859 = vadd.f32 0.0, %v858
      %860 = vmatprep.mubr.bf16.mxu0 0
      %861 = vmatmul.mubr.bf16.gmra.mrb[0].mxu0 %v809
      %v862 = vpop.f32.mrb[0].mxu0
      %v863 = vadd.f32 0.0, %v862
      %v864 = vpop.f32.mrb[0].mxu0
      %v865 = vadd.f32 0.0, %v864
      %v866 = vpop.f32.mrb[0].mxu0
      %v867 = vadd.f32 0.0, %v866
      %v868 = vpop.f32.mrb[0].mxu0
      %v869 = vadd.f32 0.0, %v868
      %870 = vdwg.mxu0
      %v871 = vld [vmem:[%s5] sm:$0xf]
      %v872 = vld [vmem:[%s5 + $0x4] sm:$0xf]
      %v873 = vld [vmem:[%s5 + $0x8] sm:$0xf]
      %v874 = vld [vmem:[%s5 + $0xc] sm:$0xf]
      %v875 = vpack.c.bf16 %v857, %v853
      %v876 = vpack.c.bf16 %v859, %v855
      %v877 = vpack.c.bf16 %v867, %v863
      %v878 = vpack.c.bf16 %v869, %v865
      %v883 = vunpack.c.l.b16 %v871
      %v884 = vunpack.c.l.b16 %v872
      %v885 = vunpack.c.l.b16 %v873
      %v886 = vunpack.c.l.b16 %v874
      %v887 = vpack.c.b16 %v884, %v883
      %v888 = vpack.c.b16 %v886, %v885
      %v890 = vsel %vm648, %v887, 0
      %v893 = vsel %vm648, %v888, 0
      %895 = vmatprep.subr.bf16.mxu0 %v876
      %896 = vmatpush1.bf16.msra.mxu0 %v875
      %897 = vmatprep.subr.bf16.mxu0 %v878
      %898 = vmatpush1.bf16.msra.mxu0 %v877
      %899 = vmatprep.subr.bf16.mxu0 0
      %900 = vmatpush1.bf16.msra.mxu0 0
      %901 = vmatprep.subr.bf16.mxu0 0
      %902 = vmatpush1.bf16.msra.mxu0 0
      %903 = vmatprep.subr.bf16.mxu0 0
      %904 = vmatpush1.bf16.msra.mxu0 0
      %905 = vmatprep.subr.bf16.mxu0 0
      %906 = vmatpush1.bf16.msra.mxu0 0
      %907 = vmatprep.subr.bf16.mxu0 0
      %908 = vmatpush1.bf16.msra.mxu0 0
      %909 = vmatprep.subr.bf16.mxu0 0
      %910 = vmatpush1.bf16.msra.mxu0 0
      %911 = vmatprep.subr.bf16.mxu0 0
      %912 = vmatpush1.bf16.msra.mxu0 0
      %913 = vmatprep.subr.bf16.mxu0 0
      %914 = vmatpush1.bf16.msra.mxu0 0
      %915 = vmatprep.subr.bf16.mxu0 0
      %916 = vmatpush1.bf16.msra.mxu0 0
      %917 = vmatprep.subr.bf16.mxu0 0
      %918 = vmatpush1.bf16.msra.mxu0 0
      %919 = vmatprep.subr.bf16.mxu0 0
      %920 = vmatpush1.bf16.msra.mxu0 0
      %921 = vmatprep.subr.bf16.mxu0 0
      %922 = vmatpush1.bf16.msra.mxu0 0
      %923 = vmatprep.subr.bf16.mxu0 0
      %924 = vmatpush1.bf16.msra.mxu0 0
      %925 = vmatprep.subr.bf16.mxu0 0
      %926 = vmatpush1.bf16.msra.mxu0 0
      %927 = vmatprep.mubr.bf16.mxu0 0
      %928 = vmatmul.mubr.bf16.gmra.mrb[0].mxu0 %v890
      %v929 = vpop.f32.mrb[0].mxu0
      %v930 = vadd.f32 0.0, %v929
      %v931 = vpop.f32.mrb[0].mxu0
      %v932 = vadd.f32 0.0, %v931
      %v933 = vpop.f32.mrb[0].mxu0
      %v934 = vadd.f32 0.0, %v933
      %v935 = vpop.f32.mrb[0].mxu0
      %v936 = vadd.f32 0.0, %v935
      %937 = vmatprep.mubr.bf16.mxu0 0
      %938 = vmatmul.mubr.bf16.gmra.mrb[0].mxu0 %v893
      %v939 = vpop.f32.mrb[0].mxu0
      %v940 = vadd.f32 0.0, %v939
      %v941 = vpop.f32.mrb[0].mxu0
      %v942 = vadd.f32 0.0, %v941
      %v943 = vpop.f32.mrb[0].mxu0
      %v944 = vadd.f32 0.0, %v943
      %v945 = vpop.f32.mrb[0].mxu0
      %v946 = vadd.f32 0.0, %v945
      %947 = vdwg.mxu0
      %v948 = vadd.f32 %v602, %v930
      %v949 = vadd.f32 %v603, %v932
      %v950 = vadd.f32 %v604, %v934
      %v951 = vadd.f32 %v605, %v936
      %v952 = vadd.f32 %v606, %v940
      %v953 = vadd.f32 %v607, %v942
      %v954 = vadd.f32 %v608, %v944
      %v955 = vadd.f32 %v609, %v946
      %956 = vset.pattern.permute.xlu0 1
      %957 = vperm.xlu0 %956, %v436
      %v958 = vpop.permute.xlu0 %957
      %960 = vset.pattern.permute.xlu0 1
      %961 = vperm.xlu0 %960, %v437
      %v962 = vpop.permute.xlu0 %961
      %964 = vset.pattern.permute.xlu0 1
      %965 = vperm.xlu0 %964, %v438
      %v966 = vpop.permute.xlu0 %965
      %968 = vset.pattern.permute.xlu0 1
      %969 = vperm.xlu0 %968, %v439
      %v970 = vpop.permute.xlu0 %969
      %v972 = vadd.f32 %v948, %v958
      %v973 = vadd.f32 %v949, %v958
      %v974 = vadd.f32 %v950, %v962
      %v975 = vadd.f32 %v951, %v962
      %v976 = vadd.f32 %v952, %v966
      %v977 = vadd.f32 %v953, %v966
      %v978 = vadd.f32 %v954, %v970
      %v979 = vadd.f32 %v955, %v970
      %v980 = vld [vmem:[%s6] sm:$0x3]
      %v981 = vpack.c.bf16 %v974, %v972
      %v982 = vpack.c.bf16 %v975, %v973
      %v983 = vpack.c.bf16 %v978, %v976
      %v984 = vpack.c.bf16 %v979, %v977
      %985 = vset.pattern.permute.xlu0 2
      %986 = vperm.xlu0 %985, %v436
      %v987 = vpop.permute.xlu0 %986
      %v990 = vsel %vm648, %v980, 0
      %992 = vmatprep.subr.bf16.mxu0 %v982
      %993 = vmatpush1.bf16.msra.mxu0 %v981
      %994 = vmatprep.subr.bf16.mxu0 %v984
      %995 = vmatpush1.bf16.msra.mxu0 %v983
      %996 = vmatprep.subr.bf16.mxu0 0
      %997 = vmatpush1.bf16.msra.mxu0 0
      %998 = vmatprep.subr.bf16.mxu0 0
      %999 = vmatpush1.bf16.msra.mxu0 0
      %1000 = vmatprep.subr.bf16.mxu0 0
      %1001 = vmatpush1.bf16.msra.mxu0 0
      %1002 = vmatprep.subr.bf16.mxu0 0
      %1003 = vmatpush1.bf16.msra.mxu0 0
      %1004 = vmatprep.subr.bf16.mxu0 0
      %1005 = vmatpush1.bf16.msra.mxu0 0
      %1006 = vmatprep.subr.bf16.mxu0 0
      %1007 = vmatpush1.bf16.msra.mxu0 0
      %1008 = vmatprep.subr.bf16.mxu0 0
      %1009 = vmatpush1.bf16.msra.mxu0 0
      %1010 = vmatprep.subr.bf16.mxu0 0
      %1011 = vmatpush1.bf16.msra.mxu0 0
      %1012 = vmatprep.subr.bf16.mxu0 0
      %1013 = vmatpush1.bf16.msra.mxu0 0
      %1014 = vmatprep.subr.bf16.mxu0 0
      %1015 = vmatpush1.bf16.msra.mxu0 0
      %1016 = vmatprep.subr.bf16.mxu0 0
      %1017 = vmatpush1.bf16.msra.mxu0 0
      %1018 = vmatprep.subr.bf16.mxu0 0
      %1019 = vmatpush1.bf16.msra.mxu0 0
      %1020 = vmatprep.subr.bf16.mxu0 0
      %1021 = vmatpush1.bf16.msra.mxu0 0
      %1022 = vmatprep.subr.bf16.mxu0 0
      %1023 = vmatpush1.bf16.msra.mxu0 0
      %1024 = vmatprep.mubr.bf16.mxu0 0
      %1025 = vmatmul.mubr.bf16.gmra.mrb[0].mxu0 %v990
      %v1026 = vpop.f32.mrb[0].mxu0
      %v1027 = vadd.f32 %v987, %v1026
      %v1028 = vpop.f32.mrb[0].mxu0
      %v1029 = vadd.f32 %v987, %v1028
      %v1030 = vpop.f32.mrb[0].mxu0
      %v1031 = vpop.f32.mrb[0].mxu0
      %1032 = vdwg.mxu0
      %v1035 = vcombine.low %v1027, %v1029
      %1037 = vst [vmem:[%s427] sm:$0xff] %v1035
      %s1038 = smul.u32 2, %s25
      %p1039 = scmp.lt.s32.totalorder %s24, 1
      %s1040 = scalar_select %p1039, %s24, 1
      %p1041 = scmp.lt.s32.totalorder %s1038, 1
      %s1042 = scalar_select %p1041, %s1038, 1
      %s1043 = smul.addr %s1040, 2
      %s1044 = sadd.s32 %s1042, %s1043
      %s1045 = smul.addr %s1044, 4
      %s1046 = scalar_lea.vmem %s9, %s1045
      // Predicated region
      $region57: #{_forward.1} parent=55 // pred_check
        %p1047 = pneg %p263
      $region58: #{_forward.1} parent=55 // pred_check_branch
        %1049 = sbr.rel (%p1047) target = $region60
      $region59: #{_forward.1} parent=55 // pred_region
        %s1050 = smul.u32 2, %s25
      $region60: #{_forward.1} parent=55 // pred_fallthru
        _
    $region56: #{_forward.1} parent=5 // pred_fallthru
      _
    %p1051 = scmp.le.s32.totalorder 2, %s15
    // Predicated region
    $region61: #{_forward.1} parent=5 // pred_check
      %p1052 = pneg %p1051
    $region62: #{_forward.1} parent=5 // pred_check_branch
      %1054 = sbr.rel (%p1052) target = $region64
    $region63: #{_forward.1} parent=5 // pred_region
      %s1055 = ssub.s32 %s15, 2
      // Predicated region
      $region65: #{_forward.1} parent=63 // pred_check
        %p1056 = pneg %p269
      $region66: #{_forward.1} parent=63 // pred_check_branch
        %1058 = sbr.rel (%p1056) target = $region68
      $region67: #{_forward.1} parent=63 // pred_region
        %s1059 = smul.u32 2, %s27
        %p1060 = scmp.lt.s32.totalorder %s26, 1
        %s1061 = scalar_select %p1060, %s26, 1
        %p1062 = scmp.lt.s32.totalorder %s1059, 1
        %s1063 = scalar_select %p1062, %s1059, 1
        %s1064 = smul.addr %s1061, 2
        %s1065 = sadd.s32 %s1063, %s1064
        %s1066 = smul.addr %s1065, 4
        %s1067 = scalar_lea.vmem %s9, %s1066
      $region68: #{_forward.1} parent=63 // pred_fallthru
        _
    $region64: #{_forward.1} parent=5 // pred_fallthru
      _
  $region6: #{_forward.1} parent=0 // loop_footer
    %s19 = sadd.s32 1, %s15
  $region7: #{_forward.1} parent=0 // loop_footer_branch
    %14 = sbr.rel target = $region3
  $region8: #{_forward.1} parent=0 // loop_exit
    _

// kernel: _forward.1
$region0: #{_forward.1}
  #allocation0 [shape = 'u32[]', space=smem, size = 0x4, offset = 0x4, fixed_abs, tag = 'smem constant byte address 0x4 - core index']
  #allocation1 [shape = 'u32[144,128]{1,0:T(1,128)}', space=vmem, size = 0x12000, scoped, tag = 'internal scratch']
  %s0 = inlined_call_operand.vmem [shape: bf16[2,4,256], index: 0, kind: input, shape index: {}]
  %s1 = inlined_call_operand.vmem [shape: bf16[2,8,32], index: 1, kind: input, shape index: {}]
  %s2 = inlined_call_operand.vmem [shape: bf16[2,32,8], index: 2, kind: input, shape index: {}]
  %s3 = inlined_call_operand.vmem [shape: bf16[32,4], index: 3, kind: input, shape index: {}]
  %s4 = inlined_call_operand.vmem [shape: bf16[32,32], index: 4, kind: input, shape index: {}]
  %s5 = inlined_call_operand.vmem [shape: bf16[32,32], index: 5, kind: input, shape index: {}]
  %s6 = inlined_call_operand.vmem [shape: bf16[4,32], index: 6, kind: input, shape index: {}]
  %s7 = inlined_call_operand.vmem [shape: f32[2,32,1], index: 7, kind: input, shape index: {}]
  %s8 = inlined_call_operand.vmem [shape: f32[32,4], index: 8, kind: input, shape index: {}]
  %s9 = inlined_call_operand.vmem [shape: f32[2,4,256], index: 9, kind: output, shape index: {}]
  %s10 = sld [smem:[#allocation0]]
  $region69: #{_forward.1} parent=0
    _
  %s12 = ssub.s32 1, %s10
  %s13 = scalar_select 0, %s12, %s10
  loop: start=0, step=1, limit=4
  $region2: #{_forward.1} parent=0 // loop_pre_header
    _
  $region3: #{_forward.1} parent=0 // loop_header
    %s15 = sphi 0, %s19
    %p16 = scmp.ge.s32.totalorder %s15, 4
    %s22 = sphi 0, %s34
    %s23 = sphi 0, %s30
    %s24 = sphi 0, %s22
    %s25 = sphi 0, %s23
    %s26 = sphi 0, %s24
    %s27 = sphi 0, %s25
    %s39 = sphi 0, %s41
    %s42 = sphi 0, %s39
    %s43 = sphi 0, %s42
    %s59 = sphi 0, %s43
    %s65 = sphi 0, %s67
    %s68 = sphi 0, %s65
    %s69 = sphi 0, %s68
    %s85 = sphi 0, %s69
    %s91 = sphi 0, %s93
    %s94 = sphi 0, %s91
    %s95 = sphi 0, %s94
    %s111 = sphi 0, %s95
    %s115 = sphi 0, %s115
    %s117 = sphi 0, %s115
    %s118 = sphi 0, %s117
    %s132 = sphi 0, %s118
    %s136 = sphi 0, %s136
    %s138 = sphi 0, %s136
    %s139 = sphi 0, %s138
    %s153 = sphi 0, %s139
    %s157 = sphi 0, %s157
    %s159 = sphi 0, %s157
    %s160 = sphi 0, %s159
    %s174 = sphi 0, %s160
    %s178 = sphi 0, %s178
    %s180 = sphi 0, %s178
    %s181 = sphi 0, %s180
    %s195 = sphi 0, %s181
    %s201 = sphi 0, %s203
    %s204 = sphi 0, %s201
    %s205 = sphi 0, %s204
    %s221 = sphi 0, %s205
    %s225 = sphi 0, %s225
    %s227 = sphi 0, %s225
    %s228 = sphi 0, %s227
    %s242 = sphi 0, %s228
    %s250 = sphi 0, %s252
    %s253 = sphi 0, %s250
    %s254 = sphi 0, %s253
    %s270 = sphi 0, %s254
  $region4: #{_forward.1} parent=0 // loop_header_branch
    %18 = sbr.rel (%p16) target = $region8
  $region5: #{_forward.1} parent=0 // loop_body
    %s20 = ssub.s32 %s15, 1
    %s21 = ssub.s32 %s15, 2
    %s28 = sadd.s32 1, %s23
    %p29 = scmp.ge.s32.totalorder %s28, 1
    %s30 = scalar_select %p29, 0, %s28
    %s31 = sadd.s32 1, %s22
    %s32 = scalar_select %p29, %s31, %s22
    %p33 = scmp.ge.s32.totalorder %s32, 2
    %s34 = scalar_select %p33, 0, %s32
    %s35 = ssub.s32 %s22, %s34
    %s36 = ssub.s32 %s23, %s30
    %s37 = sor.u32 %s35, %s36
    %p38 = scmp.eq.s32.totalorder %s37, 0
    %s40 = sadd.s32 %s39, 1
    %s41 = scalar_select %p38, %s39, %s40
    %p44 = pneg %p38
    %p45 = scmp.eq.s32.totalorder %s15, 1
    %p46 = por %p44, %p45
    %p47 = scmp.ne.s32.totalorder %s39, %s42
    %p48 = scmp.eq.s32.totalorder %s15, 0
    %p49 = por %p47, %p48
    %p50 = scmp.ne.s32.totalorder %s39, %s42
    %p51 = scmp.eq.s32.totalorder %s20, 1
    %p52 = por %p50, %p51
    %p53 = scmp.ne.s32.totalorder %s42, %s43
    %p54 = scmp.eq.s32.totalorder %s20, 0
    %p55 = por %p53, %p54
    %p56 = scmp.ne.s32.totalorder %s42, %s43
    %p57 = scmp.eq.s32.totalorder %s21, 1
    %p58 = por %p56, %p57
    %p60 = scmp.ne.s32.totalorder %s43, %s59
    %p61 = scmp.eq.s32.totalorder %s21, 0
    %p62 = por %p60, %p61
    %s63 = ssub.s32 %s22, %s34
    %p64 = scmp.eq.s32.totalorder %s63, 0
    %s66 = sadd.s32 %s65, 1
    %s67 = scalar_select %p64, %s65, %s66
    %p70 = pneg %p64
    %p71 = scmp.eq.s32.totalorder %s15, 1
    %p72 = por %p70, %p71
    %p73 = scmp.ne.s32.totalorder %s65, %s68
    %p74 = scmp.eq.s32.totalorder %s15, 0
    %p75 = por %p73, %p74
    %p76 = scmp.ne.s32.totalorder %s65, %s68
    %p77 = scmp.eq.s32.totalorder %s20, 1
    %p78 = por %p76, %p77
    %p79 = scmp.ne.s32.totalorder %s68, %s69
    %p80 = scmp.eq.s32.totalorder %s20, 0
    %p81 = por %p79, %p80
    %p82 = scmp.ne.s32.totalorder %s68, %s69
    %p83 = scmp.eq.s32.totalorder %s21, 1
    %p84 = por %p82, %p83
    %p86 = scmp.ne.s32.totalorder %s69, %s85
    %p87 = scmp.eq.s32.totalorder %s21, 0
    %p88 = por %p86, %p87
    %s89 = ssub.s32 %s22, %s34
    %p90 = scmp.eq.s32.totalorder %s89, 0
    %s92 = sadd.s32 %s91, 1
    %s93 = scalar_select %p90, %s91, %s92
    %p96 = pneg %p90
    %p97 = scmp.eq.s32.totalorder %s15, 1
    %p98 = por %p96, %p97
    %p99 = scmp.ne.s32.totalorder %s91, %s94
    %p100 = scmp.eq.s32.totalorder %s15, 0
    %p101 = por %p99, %p100
    %p102 = scmp.ne.s32.totalorder %s91, %s94
    %p103 = scmp.eq.s32.totalorder %s20, 1
    %p104 = por %p102, %p103
    %p105 = scmp.ne.s32.totalorder %s94, %s95
    %p106 = scmp.eq.s32.totalorder %s20, 0
    %p107 = por %p105, %p106
    %p108 = scmp.ne.s32.totalorder %s94, %s95
    %p109 = scmp.eq.s32.totalorder %s21, 1
    %p110 = por %p108, %p109
    %p112 = scmp.ne.s32.totalorder %s95, %s111
    %p113 = scmp.eq.s32.totalorder %s21, 0
    %p114 = por %p112, %p113
    %s116 = sadd.s32 %s115, 1
    %p119 = scmp.eq.s32.totalorder %s15, 1
    %p120 = scmp.ne.s32.totalorder %s115, %s117
    %p121 = scmp.eq.s32.totalorder %s15, 0
    %p122 = por %p120, %p121
    %p123 = scmp.ne.s32.totalorder %s115, %s117
    %p124 = scmp.eq.s32.totalorder %s20, 1
    %p125 = por %p123, %p124
    %p126 = scmp.ne.s32.totalorder %s117, %s118
    %p127 = scmp.eq.s32.totalorder %s20, 0
    %p128 = por %p126, %p127
    %p129 = scmp.ne.s32.totalorder %s117, %s118
    %p130 = scmp.eq.s32.totalorder %s21, 1
    %p131 = por %p129, %p130
    %p133 = scmp.ne.s32.totalorder %s118, %s132
    %p134 = scmp.eq.s32.totalorder %s21, 0
    %p135 = por %p133, %p134
    %s137 = sadd.s32 %s136, 1
    %p140 = scmp.eq.s32.totalorder %s15, 1
    %p141 = scmp.ne.s32.totalorder %s136, %s138
    %p142 = scmp.eq.s32.totalorder %s15, 0
    %p143 = por %p141, %p142
    %p144 = scmp.ne.s32.totalorder %s136, %s138
    %p145 = scmp.eq.s32.totalorder %s20, 1
    %p146 = por %p144, %p145
    %p147 = scmp.ne.s32.totalorder %s138, %s139
    %p148 = scmp.eq.s32.totalorder %s20, 0
    %p149 = por %p147, %p148
    %p150 = scmp.ne.s32.totalorder %s138, %s139
    %p151 = scmp.eq.s32.totalorder %s21, 1
    %p152 = por %p150, %p151
    %p154 = scmp.ne.s32.totalorder %s139, %s153
    %p155 = scmp.eq.s32.totalorder %s21, 0
    %p156 = por %p154, %p155
    %s158 = sadd.s32 %s157, 1
    %p161 = scmp.eq.s32.totalorder %s15, 1
    %p162 = scmp.ne.s32.totalorder %s157, %s159
    %p163 = scmp.eq.s32.totalorder %s15, 0
    %p164 = por %p162, %p163
    %p165 = scmp.ne.s32.totalorder %s157, %s159
    %p166 = scmp.eq.s32.totalorder %s20, 1
    %p167 = por %p165, %p166
    %p168 = scmp.ne.s32.totalorder %s159, %s160
    %p169 = scmp.eq.s32.totalorder %s20, 0
    %p170 = por %p168, %p169
    %p171 = scmp.ne.s32.totalorder %s159, %s160
    %p172 = scmp.eq.s32.totalorder %s21, 1
    %p173 = por %p171, %p172
    %p175 = scmp.ne.s32.totalorder %s160, %s174
    %p176 = scmp.eq.s32.totalorder %s21, 0
    %p177 = por %p175, %p176
    %s179 = sadd.s32 %s178, 1
    %p182 = scmp.eq.s32.totalorder %s15, 1
    %p183 = scmp.ne.s32.totalorder %s178, %s180
    %p184 = scmp.eq.s32.totalorder %s15, 0
    %p185 = por %p183, %p184
    %p186 = scmp.ne.s32.totalorder %s178, %s180
    %p187 = scmp.eq.s32.totalorder %s20, 1
    %p188 = por %p186, %p187
    %p189 = scmp.ne.s32.totalorder %s180, %s181
    %p190 = scmp.eq.s32.totalorder %s20, 0
    %p191 = por %p189, %p190
    %p192 = scmp.ne.s32.totalorder %s180, %s181
    %p193 = scmp.eq.s32.totalorder %s21, 1
    %p194 = por %p192, %p193
    %p196 = scmp.ne.s32.totalorder %s181, %s195
    %p197 = scmp.eq.s32.totalorder %s21, 0
    %p198 = por %p196, %p197
    %s199 = ssub.s32 %s22, %s34
    %p200 = scmp.eq.s32.totalorder %s199, 0
    %s202 = sadd.s32 %s201, 1
    %s203 = scalar_select %p200, %s201, %s202
    %p206 = pneg %p200
    %p207 = scmp.eq.s32.totalorder %s15, 1
    %p208 = por %p206, %p207
    %p209 = scmp.ne.s32.totalorder %s201, %s204
    %p210 = scmp.eq.s32.totalorder %s15, 0
    %p211 = por %p209, %p210
    %p212 = scmp.ne.s32.totalorder %s201, %s204
    %p213 = scmp.eq.s32.totalorder %s20, 1
    %p214 = por %p212, %p213
    %p215 = scmp.ne.s32.totalorder %s204, %s205
    %p216 = scmp.eq.s32.totalorder %s20, 0
    %p217 = por %p215, %p216
    %p218 = scmp.ne.s32.totalorder %s204, %s205
    %p219 = scmp.eq.s32.totalorder %s21, 1
    %p220 = por %p218, %p219
    %p222 = scmp.ne.s32.totalorder %s205, %s221
    %p223 = scmp.eq.s32.totalorder %s21, 0
    %p224 = por %p222, %p223
    %s226 = sadd.s32 %s225, 1
    %p229 = scmp.eq.s32.totalorder %s15, 1
    %p230 = scmp.ne.s32.totalorder %s225, %s227
    %p231 = scmp.eq.s32.totalorder %s15, 0
    %p232 = por %p230, %p231
    %p233 = scmp.ne.s32.totalorder %s225, %s227
    %p234 = scmp.eq.s32.totalorder %s20, 1
    %p235 = por %p233, %p234
    %p236 = scmp.ne.s32.totalorder %s227, %s228
    %p237 = scmp.eq.s32.totalorder %s20, 0
    %p238 = por %p236, %p237
    %p239 = scmp.ne.s32.totalorder %s227, %s228
    %p240 = scmp.eq.s32.totalorder %s21, 1
    %p241 = por %p239, %p240
    %p243 = scmp.ne.s32.totalorder %s228, %s242
    %p244 = scmp.eq.s32.totalorder %s21, 0
    %p245 = por %p243, %p244
    %s246 = ssub.s32 %s22, %s34
    %s247 = ssub.s32 %s23, %s30
    %s248 = sor.u32 %s246, %s247
    %p249 = scmp.eq.s32.totalorder %s248, 0
    %s251 = sadd.s32 %s250, 1
    %s252 = scalar_select %p249, %s250, %s251
    %p255 = pneg %p249
    %p256 = scmp.eq.s32.totalorder %s15, 1
    %p257 = por %p255, %p256
    %p258 = scmp.ne.s32.totalorder %s250, %s253
    %p259 = scmp.eq.s32.totalorder %s15, 0
    %p260 = por %p258, %p259
    %p261 = scmp.ne.s32.totalorder %s250, %s253
    %p262 = scmp.eq.s32.totalorder %s20, 1
    %p263 = por %p261, %p262
    %p264 = scmp.ne.s32.totalorder %s253, %s254
    %p265 = scmp.eq.s32.totalorder %s20, 0
    %p266 = por %p264, %p265
    %p267 = scmp.ne.s32.totalorder %s253, %s254
    %p268 = scmp.eq.s32.totalorder %s21, 1
    %p269 = por %p267, %p268
    %p271 = scmp.ne.s32.totalorder %s254, %s270
    %p272 = scmp.eq.s32.totalorder %s21, 0
    %p273 = por %p271, %p272
    %p274 = scmp.le.s32.totalorder 1, %s15
    %p275 = scmp.lt.s32.totalorder %s15, 3
    %p276 = pnand %p274, %p275
    %p277 = pneg %p276
    // Predicated region
    $region9: #{_forward.1} parent=5 // pred_check
      _
    $region10: #{_forward.1} parent=5 // pred_check_branch
      %279 = sbr.rel (%p276) target = $region12
    $region11: #{_forward.1} parent=5 // pred_region
      %s280 = ssub.s32 %s15, 1
      // Predicated region
      $region13: #{_forward.1} parent=11 // pred_check
        %p281 = pneg %p128
      $region14: #{_forward.1} parent=11 // pred_check_branch
        %283 = sbr.rel (%p281) target = $region16
      $region15: #{_forward.1} parent=11 // pred_region
        _
      $region16: #{_forward.1} parent=11 // pred_fallthru
        _
      // Predicated region
      $region17: #{_forward.1} parent=11 // pred_check
        %p284 = pneg %p149
      $region18: #{_forward.1} parent=11 // pred_check_branch
        %286 = sbr.rel (%p284) target = $region20
      $region19: #{_forward.1} parent=11 // pred_region
        _
      $region20: #{_forward.1} parent=11 // pred_fallthru
        _
      // Predicated region
      $region21: #{_forward.1} parent=11 // pred_check
        %p287 = pneg %p170
      $region22: #{_forward.1} parent=11 // pred_check_branch
        %289 = sbr.rel (%p287) target = $region24
      $region23: #{_forward.1} parent=11 // pred_region
        _
      $region24: #{_forward.1} parent=11 // pred_fallthru
        _
      // Predicated region
      $region25: #{_forward.1} parent=11 // pred_check
        %p290 = pneg %p191
      $region26: #{_forward.1} parent=11 // pred_check_branch
        %292 = sbr.rel (%p290) target = $region28
      $region27: #{_forward.1} parent=11 // pred_region
        _
      $region28: #{_forward.1} parent=11 // pred_fallthru
        _
      // Predicated region
      $region29: #{_forward.1} parent=11 // pred_check
        %p293 = pneg %p238
      $region30: #{_forward.1} parent=11 // pred_check_branch
        %295 = sbr.rel (%p293) target = $region32
      $region31: #{_forward.1} parent=11 // pred_region
        _
      $region32: #{_forward.1} parent=11 // pred_fallthru
        _
    $region12: #{_forward.1} parent=5 // pred_fallthru
      _
    %p296 = scmp.lt.s32.totalorder %s15, 2
    // Predicated region
    $region33: #{_forward.1} parent=5 // pred_check
      %p297 = pneg %p296
    $region34: #{_forward.1} parent=5 // pred_check_branch
      %299 = sbr.rel (%p297) target = $region36
    $region35: #{_forward.1} parent=5 // pred_region
      // Predicated region
      $region37: #{_forward.1} parent=35 // pred_check
        %p300 = pneg %p49
      $region38: #{_forward.1} parent=35 // pred_check_branch
        %302 = sbr.rel (%p300) target = $region40
      $region39: #{_forward.1} parent=35 // pred_region
        %s303 = smul.u32 2, %s23
        %p304 = scmp.lt.s32.totalorder %s22, 1
        %s305 = scalar_select %p304, %s22, 1
        %p306 = scmp.lt.s32.totalorder %s303, 1
        %s307 = scalar_select %p306, %s303, 1
        %s308 = smul.addr %s305, 2
        %s309 = sadd.s32 %s307, %s308
        %s310 = smul.addr %s309, 2
        %s311 = scalar_lea.vmem %s0, %s310
        %s312 = smul.u32 2, %s23
      $region40: #{_forward.1} parent=35 // pred_fallthru
        _
      // Predicated region
      $region41: #{_forward.1} parent=35 // pred_check
        %p313 = pneg %p75
      $region42: #{_forward.1} parent=35 // pred_check_branch
        %315 = sbr.rel (%p313) target = $region44
      $region43: #{_forward.1} parent=35 // pred_region
        %p316 = scmp.lt.s32.totalorder %s22, 1
        %s317 = scalar_select %p316, %s22, 1
        %s318 = smul.addr %s317, 4
        %s319 = scalar_lea.vmem %s1, %s318
      $region44: #{_forward.1} parent=35 // pred_fallthru
        _
      // Predicated region
      $region45: #{_forward.1} parent=35 // pred_check
        %p320 = pneg %p101
      $region46: #{_forward.1} parent=35 // pred_check_branch
        %322 = sbr.rel (%p320) target = $region48
      $region47: #{_forward.1} parent=35 // pred_region
        %p323 = scmp.lt.s32.totalorder %s22, 1
        %s324 = scalar_select %p323, %s22, 1
        %s325 = smul.addr %s324, 4
        %s326 = smul.addr %s325, 4
        %s327 = scalar_lea.vmem %s2, %s326
      $region48: #{_forward.1} parent=35 // pred_fallthru
        _
      // Predicated region
      $region49: #{_forward.1} parent=35 // pred_check
        %p328 = pneg %p211
      $region50: #{_forward.1} parent=35 // pred_check_branch
        %330 = sbr.rel (%p328) target = $region52
      $region51: #{_forward.1} parent=35 // pred_region
        %p331 = scmp.lt.s32.totalorder %s22, 1
        %s332 = scalar_select %p331, %s22, 1
        %s333 = smul.addr %s332, 4
        %s334 = smul.addr %s333, 8
        %s335 = scalar_lea.vmem %s7, %s334
      $region52: #{_forward.1} parent=35 // pred_fallthru
        _
    $region36: #{_forward.1} parent=5 // pred_fallthru
      _
    %p336 = scmp.le.s32.totalorder 1, %s15
    %p337 = scmp.lt.s32.totalorder %s15, 3
    %p338 = pnand %p336, %p337
    %p339 = pneg %p338
    // Predicated region
    $region53: #{_forward.1} parent=5 // pred_check
      _
    $region54: #{_forward.1} parent=5 // pred_check_branch
      %341 = sbr.rel (%p338) target = $region56
    $region55: #{_forward.1} parent=5 // pred_region
      %s342 = ssub.s32 %s15, 1
      %s343 = smul.u32 2, %s25
      %p344 = scmp.lt.s32.totalorder %s24, 1
      %s345 = scalar_select %p344, %s24, 1
      %p346 = scmp.lt.s32.totalorder %s343, 1
      %s347 = scalar_select %p346, %s343, 1
      %s348 = smul.addr %s345, 2
      %s349 = sadd.s32 %s347, %s348
      %s350 = smul.addr %s349, 2
      %s351 = scalar_lea.vmem %s0, %s350
      %p352 = pneg %p55
      %p353 = pneg %p52
      %p354 = scmp.lt.s32.totalorder %s24, 1
      %s355 = scalar_select %p354, %s24, 1
      %s356 = smul.addr %s355, 4
      %s357 = scalar_lea.vmem %s1, %s356
      %p358 = pneg %p81
      %p359 = pneg %p78
      %p360 = scmp.lt.s32.totalorder %s24, 1
      %s361 = scalar_select %p360, %s24, 1
      %s362 = smul.addr %s361, 4
      %s363 = smul.addr %s362, 4
      %s364 = scalar_lea.vmem %s2, %s363
      %p365 = pneg %p107
      %p366 = pneg %p104
      %p367 = pneg %p128
      %p368 = pneg %p125
      %p369 = pneg %p149
      %p370 = pneg %p146
      %p371 = pneg %p170
      %p372 = pneg %p167
      %p373 = pneg %p191
      %p374 = pneg %p188
      %p375 = scmp.lt.s32.totalorder %s24, 1
      %s376 = scalar_select %p375, %s24, 1
      %s377 = smul.addr %s376, 4
      %s378 = smul.addr %s377, 8
      %s379 = scalar_lea.vmem %s7, %s378
      %p380 = pneg %p217
      %p381 = pneg %p214
      %p382 = pneg %p238
      %p383 = pneg %p235
      %p384 = pneg %p266
      %p385 = pneg %p263
      %s386 = smul.u32 2, %s25
      %p387 = scmp.lt.s32.totalorder %s24, 1
      %s388 = scalar_select %p387, %s24, 1
      %p389 = scmp.lt.s32.totalorder %s386, 1
      %s390 = scalar_select %p389, %s386, 1
      %s391 = smul.addr %s388, 2
      %s392 = sadd.s32 %s390, %s391
      %s393 = smul.addr %s392, 4
      %s394 = scalar_lea.vmem %s9, %s393
      %s395 = smul.u32 2, %s25
      %p396 = scmp.lt.s32.totalorder %s24, 1
      %s397 = scalar_select %p396, %s24, 1
      %p398 = scmp.lt.s32.totalorder %s395, 1
      %s399 = scalar_select %p398, %s395, 1
      %s400 = smul.addr %s397, 2
      %s401 = sadd.s32 %s399, %s400
      %s402 = smul.addr %s401, 2
      %s403 = scalar_lea.vmem %s0, %s402
      %s404 = smul.u32 2, %s25
      %p405 = scmp.lt.s32.totalorder %s24, 1
      %s406 = scalar_select %p405, %s24, 1
      %s407 = smul.addr %s406, 4
      %s408 = scalar_lea.vmem %s1, %s407
      %p409 = scmp.lt.s32.totalorder %s24, 1
      %s410 = scalar_select %p409, %s24, 1
      %s411 = smul.addr %s410, 4
      %s412 = smul.addr %s411, 4
      %s413 = scalar_lea.vmem %s2, %s412
      %p414 = scmp.lt.s32.totalorder %s24, 1
      %s415 = scalar_select %p414, %s24, 1
      %s416 = smul.addr %s415, 4
      %s417 = smul.addr %s416, 8
      %s418 = scalar_lea.vmem %s7, %s417
      %s419 = smul.u32 2, %s25
      %p420 = scmp.lt.s32.totalorder %s24, 1
      %s421 = scalar_select %p420, %s24, 1
      %p422 = scmp.lt.s32.totalorder %s419, 1
      %s423 = scalar_select %p422, %s419, 1
      %s424 = smul.addr %s421, 2
      %s425 = sadd.s32 %s423, %s424
      %s426 = smul.addr %s425, 4
      %s427 = scalar_lea.vmem %s9, %s426
      %s428 = smul.u32 2, %s25
      %v430 = vld [vmem:[%s403] sm:$0xf]
      %v431 = vld [vmem:[%s408] sm:$0xf]
      %v432 = vld [vmem:[%s413] sm:$0xf]
      %v433 = vld [vmem:[%s413 + $0x4] sm:$0xf]
      %v434 = vld [vmem:[%s413 + $0x8] sm:$0xf]
      %v435 = vld [vmem:[%s413 + $0xc] sm:$0xf]
      %v436 = vld [vmem:[%s8] sm:$0xff]
      %v437 = vld [vmem:[%s8 + $0x8] sm:$0xff]
      %v438 = vld [vmem:[%s8 + $0x10] sm:$0xff]
      %v439 = vld [vmem:[%s8 + $0x18] sm:$0xff]
      %v440 = vld [vmem:[%s3] sm:$0xf]
      %v441 = vld [vmem:[%s3 + $0x4] sm:$0xf]
      %v442 = vld [vmem:[%s3 + $0x8] sm:$0xf]
      %v443 = vld [vmem:[%s3 + $0xc] sm:$0xf]
      %v444 = vld [vmem:[%s418] sm:$0xff]
      %v445 = vld [vmem:[%s418 + $0x8] sm:$0xff]
      %v446 = vld [vmem:[%s418 + $0x10] sm:$0xff]
      %v447 = vld [vmem:[%s418 + $0x18] sm:$0xff]
      %449 = vset.pattern.permute.xlu0 0
      %450 = vperm.xlu0 %449, %v444
      %v451 = vpop.permute.xlu0 %450
      %454 = vset.pattern.permute.xlu0 0
      %455 = vperm.xlu0 %454, %v445
      %v456 = vpop.permute.xlu0 %455
      %459 = vset.pattern.permute.xlu0 0
      %460 = vperm.xlu0 %459, %v446
      %v461 = vpop.permute.xlu0 %460
      %464 = vset.pattern.permute.xlu0 0
      %465 = vperm.xlu0 %464, %v447
      %v466 = vpop.permute.xlu0 %465
      %v472 = vunpack.c.l.b16 %v440
      %v473 = vunpack.c.l.b16 %v441
      %v474 = vunpack.c.l.b16 %v442
      %v475 = vunpack.c.l.b16 %v443
      %v476 = vpack.c.b16 %v473, %v472
      %v477 = vpack.c.b16 %v475, %v474
      %v480 = vunpack.c.l.s4 1983009808
      %v481 = vunpack.c.0.s8 %v480
      %v482 = vlaneseq
      %v483 = vshrl.u32 %v482, 7
      %v484 = vsub.s32 %v481, %v483
      %v485 = vrot.slane %v430, %v484
      %v486 = vcombine.high %v485, %v485
      %vm487 = vcmask 31744
      %v489 = vsel %vm487, %v476, 0
      %v492 = vsel %vm487, %v477, 0
      %vm494 = vcmask 1041408
      %v496 = vsel %vm494, %v485, 0
      %v499 = vsel %vm494, %v486, 0
      %501 = vmatprep.subr.bf16.mxu0 %v499
      %502 = vmatpush1.bf16.msra.mxu0 %v496
      %503 = vmatprep.subr.bf16.mxu0 0
      %504 = vmatpush1.bf16.msra.mxu0 0
      %505 = vmatprep.subr.bf16.mxu0 0
      %506 = vmatpush1.bf16.msra.mxu0 0
      %507 = vmatprep.subr.bf16.mxu0 0
      %508 = vmatpush1.bf16.msra.mxu0 0
      %509 = vmatprep.subr.bf16.mxu0 0
      %510 = vmatpush1.bf16.msra.mxu0 0
      %511 = vmatprep.subr.bf16.mxu0 0
      %512 = vmatpush1.bf16.msra.mxu0 0
      %513 = vmatprep.subr.bf16.mxu0 0
      %514 = vmatpush1.bf16.msra.mxu0 0
      %515 = vmatprep.subr.bf16.mxu0 0
      %516 = vmatpush1.bf16.msra.mxu0 0
      %517 = vmatprep.subr.bf16.mxu0 0
      %518 = vmatpush1.bf16.msra.mxu0 0
      %519 = vmatprep.subr.bf16.mxu0 0
      %520 = vmatpush1.bf16.msra.mxu0 0
      %521 = vmatprep.subr.bf16.mxu0 0
      %522 = vmatpush1.bf16.msra.mxu0 0
      %523 = vmatprep.subr.bf16.mxu0 0
      %524 = vmatpush1.bf16.msra.mxu0 0
      %525 = vmatprep.subr.bf16.mxu0 0
      %526 = vmatpush1.bf16.msra.mxu0 0
      %527 = vmatprep.subr.bf16.mxu0 0
      %528 = vmatpush1.bf16.msra.mxu0 0
      %529 = vmatprep.subr.bf16.mxu0 0
      %530 = vmatpush1.bf16.msra.mxu0 0
      %531 = vmatprep.subr.bf16.mxu0 0
      %532 = vmatpush1.bf16.msra.mxu0 0
      %533 = vmatprep.mubr.bf16.mxu0 0
      %534 = vmatmul.mubr.bf16.gmra.mrb[0].mxu0 %v489
      %v535 = vpop.f32.mrb[0].mxu0
      %v536 = vadd.f32 %v451, %v535
      %v537 = vpop.f32.mrb[0].mxu0
      %v538 = vadd.f32 %v451, %v537
      %v539 = vpop.f32.mrb[0].mxu0
      %v540 = vadd.f32 %v456, %v539
      %v541 = vpop.f32.mrb[0].mxu0
      %v542 = vadd.f32 %v456, %v541
      %543 = vmatprep.mubr.bf16.mxu0 0
      %544 = vmatmul.mubr.bf16.gmra.mrb[0].mxu0 %v492
      %v545 = vpop.f32.mrb[0].mxu0
      %v546 = vadd.f32 %v461, %v545
      %v547 = vpop.f32.mrb[0].mxu0
      %v548 = vadd.f32 %v461, %v547
      %v549 = vpop.f32.mrb[0].mxu0
      %v550 = vadd.f32 %v466, %v549
      %v551 = vpop.f32.mrb[0].mxu0
      %v552 = vadd.f32 %v466, %v551
      %553 = vdwg.mxu0
      %v554 = vxor.u32 %v536, 2147483648
      %v555 = vxor.u32 %v538, 2147483648
      %v556 = vxor.u32 %v540, 2147483648
      %v557 = vxor.u32 %v542, 2147483648
      %v558 = vxor.u32 %v546, 2147483648
      %v559 = vxor.u32 %v548, 2147483648
      %v560 = vxor.u32 %v550, 2147483648
      %v561 = vxor.u32 %v552, 2147483648
      %v562 = vmul.f32 %v554, 1.442695
      %v563 = vpow.pop %v562
      %v564 = vmul.f32 %v555, 1.442695
      %v565 = vpow.pop %v564
      %v566 = vmul.f32 %v556, 1.442695
      %v567 = vpow.pop %v566
      %v568 = vmul.f32 %v557, 1.442695
      %v569 = vpow.pop %v568
      %v570 = vmul.f32 %v558, 1.442695
      %v571 = vpow.pop %v570
      %v572 = vmul.f32 %v559, 1.442695
      %v573 = vpow.pop %v572
      %v574 = vmul.f32 %v560, 1.442695
      %v575 = vpow.pop %v574
      %v576 = vmul.f32 %v561, 1.442695
      %v577 = vpow.pop %v576
      %v578 = vadd.f32 %v563, 1.0
      %v579 = vadd.f32 %v565, 1.0
      %v580 = vadd.f32 %v567, 1.0
      %v581 = vadd.f32 %v569, 1.0
      %v582 = vadd.f32 %v571, 1.0
      %v583 = vadd.f32 %v573, 1.0
      %v584 = vadd.f32 %v575, 1.0
      %v585 = vadd.f32 %v577, 1.0
      %v586 = vrcp.pop %v578
      %v587 = vmul.f32 1.0, %v586
      %v588 = vrcp.pop %v579
      %v589 = vmul.f32 1.0, %v588
      %v590 = vrcp.pop %v580
      %v591 = vmul.f32 1.0, %v590
      %v592 = vrcp.pop %v581
      %v593 = vmul.f32 1.0, %v592
      %v594 = vrcp.pop %v582
      %v595 = vmul.f32 1.0, %v594
      %v596 = vrcp.pop %v583
      %v597 = vmul.f32 1.0, %v596
      %v598 = vrcp.pop %v584
      %v599 = vmul.f32 1.0, %v598
      %v600 = vrcp.pop %v585
      %v601 = vmul.f32 1.0, %v600
      %v602 = vmul.f32 %v536, %v587
      %v603 = vmul.f32 %v538, %v589
      %v604 = vmul.f32 %v540, %v591
      %v605 = vmul.f32 %v542, %v593
      %v606 = vmul.f32 %v546, %v595
      %v607 = vmul.f32 %v548, %v597
      %v608 = vmul.f32 %v550, %v599
      %v609 = vmul.f32 %v552, %v601
      %v610 = vld [vmem:[%s4] sm:$0xf]
      %v611 = vld [vmem:[%s4 + $0x4] sm:$0xf]
      %v612 = vld [vmem:[%s4 + $0x8] sm:$0xf]
      %v613 = vld [vmem:[%s4 + $0xc] sm:$0xf]
      %v614 = vpack.c.bf16 %v604, %v602
      %v615 = vpack.c.bf16 %v605, %v603
      %v616 = vpack.c.bf16 %v608, %v606
      %v617 = vpack.c.bf16 %v609, %v607
      %619 = vset.pattern.permute.xlu0 0
      %620 = vperm.xlu0 %619, %v436
      %v621 = vpop.permute.xlu0 %620
      %624 = vset.pattern.permute.xlu0 0
      %625 = vperm.xlu0 %624, %v437
      %v626 = vpop.permute.xlu0 %625
      %629 = vset.pattern.permute.xlu0 0
      %630 = vperm.xlu0 %629, %v438
      %v631 = vpop.permute.xlu0 %630
      %634 = vset.pattern.permute.xlu0 0
      %635 = vperm.xlu0 %634, %v439
      %v636 = vpop.permute.xlu0 %635
      %v642 = vunpack.c.l.b16 %v610
      %v643 = vunpack.c.l.b16 %v611
      %v644 = vunpack.c.l.b16 %v612
      %v645 = vunpack.c.l.b16 %v613
      %v646 = vpack.c.b16 %v643, %v642
      %v647 = vpack.c.b16 %v645, %v644
      %vm648 = vcmask 261120
      %v650 = vsel %vm648, %v646, 0
      %v653 = vsel %vm648, %v647, 0
      %655 = vmatprep.subr.bf16.mxu0 %v615
      %656 = vmatpush1.bf16.msra.mxu0 %v614
      %657 = vmatprep.subr.bf16.mxu0 %v617
      %658 = vmatpush1.bf16.msra.mxu0 %v616
      %659 = vmatprep.subr.bf16.mxu0 0
      %660 = vmatpush1.bf16.msra.mxu0 0
      %661 = vmatprep.subr.bf16.mxu0 0
      %662 = vmatpush1.bf16.msra.mxu0 0
      %663 = vmatprep.subr.bf16.mxu0 0
      %664 = vmatpush1.bf16.msra.mxu0 0
      %665 = vmatprep.subr.bf16.mxu0 0
      %666 = vmatpush1.bf16.msra.mxu0 0
      %667 = vmatprep.subr.bf16.mxu0 0
      %668 = vmatpush1.bf16.msra.mxu0 0
      %669 = vmatprep.subr.bf16.mxu0 0
      %670 = vmatpush1.bf16.msra.mxu0 0
      %671 = vmatprep.subr.bf16.mxu0 0
      %672 = vmatpush1.bf16.msra.mxu0 0
      %673 = vmatprep.subr.bf16.mxu0 0
      %674 = vmatpush1.bf16.msra.mxu0 0
      %675 = vmatprep.subr.bf16.mxu0 0
      %676 = vmatpush1.bf16.msra.mxu0 0
      %677 = vmatprep.subr.bf16.mxu0 0
      %678 = vmatpush1.bf16.msra.mxu0 0
      %679 = vmatprep.subr.bf16.mxu0 0
      %680 = vmatpush1.bf16.msra.mxu0 0
      %681 = vmatprep.subr.bf16.mxu0 0
      %682 = vmatpush1.bf16.msra.mxu0 0
      %683 = vmatprep.subr.bf16.mxu0 0
      %684 = vmatpush1.bf16.msra.mxu0 0
      %685 = vmatprep.subr.bf16.mxu0 0
      %686 = vmatpush1.bf16.msra.mxu0 0
      %687 = vmatprep.mubr.bf16.mxu0 0
      %688 = vmatmul.mubr.bf16.gmra.mrb[0].mxu0 %v650
      %v689 = vpop.f32.mrb[0].mxu0
      %v690 = vadd.f32 %v621, %v689
      %v691 = vpop.f32.mrb[0].mxu0
      %v692 = vadd.f32 %v621, %v691
      %v693 = vpop.f32.mrb[0].mxu0
      %v694 = vadd.f32 %v626, %v693
      %v695 = vpop.f32.mrb[0].mxu0
      %v696 = vadd.f32 %v626, %v695
      %697 = vmatprep.mubr.bf16.mxu0 0
      %698 = vmatmul.mubr.bf16.gmra.mrb[0].mxu0 %v653
      %v699 = vpop.f32.mrb[0].mxu0
      %v700 = vadd.f32 %v631, %v699
      %v701 = vpop.f32.mrb[0].mxu0
      %v702 = vadd.f32 %v631, %v701
      %v703 = vpop.f32.mrb[0].mxu0
      %v704 = vadd.f32 %v636, %v703
      %v705 = vpop.f32.mrb[0].mxu0
      %v706 = vadd.f32 %v636, %v705
      %707 = vdwg.mxu0
      %v708 = vpack.c.bf16 %v694, %v690
      %v709 = vpack.c.bf16 %v696, %v692
      %v710 = vpack.c.bf16 %v704, %v700
      %v711 = vpack.c.bf16 %v706, %v702
      %v713 = vsel %vm648, %v431, 0
      %715 = vmatprep.subr.bf16.mxu0 %v709
      %716 = vmatpush1.bf16.msra.mxu0 %v708
      %717 = vmatprep.subr.bf16.mxu0 %v711
      %718 = vmatpush1.bf16.msra.mxu0 %v710
      %719 = vmatprep.subr.bf16.mxu0 0
      %720 = vmatpush1.bf16.msra.mxu0 0
      %721 = vmatprep.subr.bf16.mxu0 0
      %722 = vmatpush1.bf16.msra.mxu0 0
      %723 = vmatprep.subr.bf16.mxu0 0
      %724 = vmatpush1.bf16.msra.mxu0 0
      %725 = vmatprep.subr.bf16.mxu0 0
      %726 = vmatpush1.bf16.msra.mxu0 0
      %727 = vmatprep.subr.bf16.mxu0 0
      %728 = vmatpush1.bf16.msra.mxu0 0
      %729 = vmatprep.subr.bf16.mxu0 0
      %730 = vmatpush1.bf16.msra.mxu0 0
      %731 = vmatprep.subr.bf16.mxu0 0
      %732 = vmatpush1.bf16.msra.mxu0 0
      %733 = vmatprep.subr.bf16.mxu0 0
      %734 = vmatpush1.bf16.msra.mxu0 0
      %735 = vmatprep.subr.bf16.mxu0 0
      %736 = vmatpush1.bf16.msra.mxu0 0
      %737 = vmatprep.subr.bf16.mxu0 0
      %738 = vmatpush1.bf16.msra.mxu0 0
      %739 = vmatprep.subr.bf16.mxu0 0
      %740 = vmatpush1.bf16.msra.mxu0 0
      %741 = vmatprep.subr.bf16.mxu0 0
      %742 = vmatpush1.bf16.msra.mxu0 0
      %743 = vmatprep.subr.bf16.mxu0 0
      %744 = vmatpush1.bf16.msra.mxu0 0
      %745 = vmatprep.subr.bf16.mxu0 0
      %746 = vmatpush1.bf16.msra.mxu0 0
      %747 = vmatprep.mubr.bf16.mxu0 0
      %748 = vmatmul.mubr.bf16.gmra.mrb[0].mxu0 %v713
      %v749 = vpop.f32.mrb[0].mxu0
      %v750 = vadd.f32 0.0, %v749
      %v751 = vpop.f32.mrb[0].mxu0
      %v752 = vadd.f32 0.0, %v751
      %v753 = vpop.f32.mrb[0].mxu0
      %v754 = vpop.f32.mrb[0].mxu0
      %755 = vdwg.mxu0
      %v756 = vmul.f32 %v750, 0.17677669
      %v757 = vmul.f32 %v752, 0.17677669
      %v758 = vrot.slane %v756, 4
      %v759 = vmax.f32 %v756, %v758
      %v760 = vrot.slane %v759, 2
      %v761 = vmax.f32 %v759, %v760
      %v762 = vrot.slane %v761, 1
      %v763 = vmax.f32 %v761, %v762
      %v764 = vrot.slane %v757, 4
      %v765 = vmax.f32 %v757, %v764
      %v766 = vrot.slane %v765, 2
      %v767 = vmax.f32 %v765, %v766
      %v768 = vrot.slane %v767, 1
      %v769 = vmax.f32 %v767, %v768
      %v770 = vsub.f32 %v756, %v763
      %v771 = vsub.f32 %v757, %v769
      %v772 = vmul.f32 %v770, 1.442695
      %v773 = vpow.pop %v772
      %v774 = vmul.f32 %v771, 1.442695
      %v775 = vpow.pop %v774
      %v776 = vrot.slane %v773, 4
      %v777 = vadd.f32 %v773, %v776
      %v778 = vrot.slane %v777, 2
      %v779 = vadd.f32 %v777, %v778
      %v780 = vrot.slane %v779, 1
      %v781 = vadd.f32 %v779, %v780
      %v782 = vrot.slane %v775, 4
      %v783 = vadd.f32 %v775, %v782
      %v784 = vrot.slane %v783, 2
      %v785 = vadd.f32 %v783, %v784
      %v786 = vrot.slane %v785, 1
      %v787 = vadd.f32 %v785, %v786
      %v788 = vrcp.pop %v781
      %v789 = vrcp.pop %v787
      %v790 = vmul.f32 %v773, %v788
      %v791 = vmul.f32 %v775, %v789
      %v792 = vpack.c.bf16 %v790, %v790
      %v793 = vpack.c.bf16 %v791, %v791
      %v798 = vunpack.c.l.b16 %v432
      %v799 = vunpack.c.l.b16 %v433
      %v800 = vunpack.c.l.b16 %v434
      %v801 = vunpack.c.l.b16 %v435
      %v802 = vpack.c.b16 %v799, %v798
      %v803 = vpack.c.b16 %v801, %v800
      %vm804 = vcmask 64512
      %v806 = vsel %vm804, %v802, 0
      %v809 = vsel %vm804, %v803, 0
      %vm811 = vcmask 1043456
      %v813 = vsel %vm811, %v792, 0
      %v816 = vsel %vm811, %v793, 0
      %818 = vmatprep.subr.bf16.mxu0 %v816
      %819 = vmatpush1.bf16.msra.mxu0 %v813
      %820 = vmatprep.subr.bf16.mxu0 0
      %821 = vmatpush1.bf16.msra.mxu0 0
      %822 = vmatprep.subr.bf16.mxu0 0
      %823 = vmatpush1.bf16.msra.mxu0 0
      %824 = vmatprep.subr.bf16.mxu0 0
      %825 = vmatpush1.bf16.msra.mxu0 0
      %826 = vmatprep.subr.bf16.mxu0 0
      %827 = vmatpush1.bf16.msra.mxu0 0
      %828 = vmatprep.subr.bf16.mxu0 0
      %829 = vmatpush1.bf16.msra.mxu0 0
      %830 = vmatprep.subr.bf16.mxu0 0
      %831 = vmatpush1.bf16.msra.mxu0 0
      %832 = vmatprep.subr.bf16.mxu0 0
      %833 = vmatpush1.bf16.msra.mxu0 0
      %834 = vmatprep.subr.bf16.mxu0 0
      %835 = vmatpush1.bf16.msra.mxu0 0
      %836 = vmatprep.subr.bf16.mxu0 0
      %837 = vmatpush1.bf16.msra.mxu0 0
      %838 = vmatprep.subr.bf16.mxu0 0
      %839 = vmatpush1.bf16.msra.mxu0 0
      %840 = vmatprep.subr.bf16.mxu0 0
      %841 = vmatpush1.bf16.msra.mxu0 0
      %842 = vmatprep.subr.bf16.mxu0 0
      %843 = vmatpush1.bf16.msra.mxu0 0
      %844 = vmatprep.subr.bf16.mxu0 0
      %845 = vmatpush1.bf16.msra.mxu0 0
      %846 = vmatprep.subr.bf16.mxu0 0
      %847 = vmatpush1.bf16.msra.mxu0 0
      %848 = vmatprep.subr.bf16.mxu0 0
      %849 = vmatpush1.bf16.msra.mxu0 0
      %850 = vmatprep.mubr.bf16.mxu0 0
      %851 = vmatmul.mubr.bf16.gmra.mrb[0].mxu0 %v806
      %v852 = vpop.f32.mrb[0].mxu0
      %v853 = vadd.f32 0.0, %v852
      %v854 = vpop.f32.mrb[0].mxu0
      %v855 = vadd.f32 0.0, %v854
      %v856 = vpop.f32.mrb[0].mxu0
      %v857 = vadd.f32 0.0, %v856
      %v858 = vpop.f32.mrb[0].mxu0
      %v859 = vadd.f32 0.0, %v858
      %860 = vmatprep.mubr.bf16.mxu0 0
      %861 = vmatmul.mubr.bf16.gmra.mrb[0].mxu0 %v809
      %v862 = vpop.f32.mrb[0].mxu0
      %v863 = vadd.f32 0.0, %v862
      %v864 = vpop.f32.mrb[0].mxu0
      %v865 = vadd.f32 0.0, %v864
      %v866 = vpop.f32.mrb[0].mxu0
      %v867 = vadd.f32 0.0, %v866
      %v868 = vpop.f32.mrb[0].mxu0
      %v869 = vadd.f32 0.0, %v868
      %870 = vdwg.mxu0
      %v871 = vld [vmem:[%s5] sm:$0xf]
      %v872 = vld [vmem:[%s5 + $0x4] sm:$0xf]
      %v873 = vld [vmem:[%s5 + $0x8] sm:$0xf]
      %v874 = vld [vmem:[%s5 + $0xc] sm:$0xf]
      %v875 = vpack.c.bf16 %v857, %v853
      %v876 = vpack.c.bf16 %v859, %v855
      %v877 = vpack.c.bf16 %v867, %v863
      %v878 = vpack.c.bf16 %v869, %v865
      %v883 = vunpack.c.l.b16 %v871
      %v884 = vunpack.c.l.b16 %v872
      %v885 = vunpack.c.l.b16 %v873
      %v886 = vunpack.c.l.b16 %v874
      %v887 = vpack.c.b16 %v884, %v883
      %v888 = vpack.c.b16 %v886, %v885
      %v890 = vsel %vm648, %v887, 0
      %v893 = vsel %vm648, %v888, 0
      %895 = vmatprep.subr.bf16.mxu0 %v876
      %896 = vmatpush1.bf16.msra.mxu0 %v875
      %897 = vmatprep.subr.bf16.mxu0 %v878
      %898 = vmatpush1.bf16.msra.mxu0 %v877
      %899 = vmatprep.subr.bf16.mxu0 0
      %900 = vmatpush1.bf16.msra.mxu0 0
      %901 = vmatprep.subr.bf16.mxu0 0
      %902 = vmatpush1.bf16.msra.mxu0 0
      %903 = vmatprep.subr.bf16.mxu0 0
      %904 = vmatpush1.bf16.msra.mxu0 0
      %905 = vmatprep.subr.bf16.mxu0 0
      %906 = vmatpush1.bf16.msra.mxu0 0
      %907 = vmatprep.subr.bf16.mxu0 0
      %908 = vmatpush1.bf16.msra.mxu0 0
      %909 = vmatprep.subr.bf16.mxu0 0
      %910 = vmatpush1.bf16.msra.mxu0 0
      %911 = vmatprep.subr.bf16.mxu0 0
      %912 = vmatpush1.bf16.msra.mxu0 0
      %913 = vmatprep.subr.bf16.mxu0 0
      %914 = vmatpush1.bf16.msra.mxu0 0
      %915 = vmatprep.subr.bf16.mxu0 0
      %916 = vmatpush1.bf16.msra.mxu0 0
      %917 = vmatprep.subr.bf16.mxu0 0
      %918 = vmatpush1.bf16.msra.mxu0 0
      %919 = vmatprep.subr.bf16.mxu0 0
      %920 = vmatpush1.bf16.msra.mxu0 0
      %921 = vmatprep.subr.bf16.mxu0 0
      %922 = vmatpush1.bf16.msra.mxu0 0
      %923 = vmatprep.subr.bf16.mxu0 0
      %924 = vmatpush1.bf16.msra.mxu0 0
      %925 = vmatprep.subr.bf16.mxu0 0
      %926 = vmatpush1.bf16.msra.mxu0 0
      %927 = vmatprep.mubr.bf16.mxu0 0
      %928 = vmatmul.mubr.bf16.gmra.mrb[0].mxu0 %v890
      %v929 = vpop.f32.mrb[0].mxu0
      %v930 = vadd.f32 0.0, %v929
      %v931 = vpop.f32.mrb[0].mxu0
      %v932 = vadd.f32 0.0, %v931
      %v933 = vpop.f32.mrb[0].mxu0
      %v934 = vadd.f32 0.0, %v933
      %v935 = vpop.f32.mrb[0].mxu0
      %v936 = vadd.f32 0.0, %v935
      %937 = vmatprep.mubr.bf16.mxu0 0
      %938 = vmatmul.mubr.bf16.gmra.mrb[0].mxu0 %v893
      %v939 = vpop.f32.mrb[0].mxu0
      %v940 = vadd.f32 0.0, %v939
      %v941 = vpop.f32.mrb[0].mxu0
      %v942 = vadd.f32 0.0, %v941
      %v943 = vpop.f32.mrb[0].mxu0
      %v944 = vadd.f32 0.0, %v943
      %v945 = vpop.f32.mrb[0].mxu0
      %v946 = vadd.f32 0.0, %v945
      %947 = vdwg.mxu0
      %v948 = vadd.f32 %v602, %v930
      %v949 = vadd.f32 %v603, %v932
      %v950 = vadd.f32 %v604, %v934
      %v951 = vadd.f32 %v605, %v936
      %v952 = vadd.f32 %v606, %v940
      %v953 = vadd.f32 %v607, %v942
      %v954 = vadd.f32 %v608, %v944
      %v955 = vadd.f32 %v609, %v946
      %956 = vset.pattern.permute.xlu0 1
      %957 = vperm.xlu0 %956, %v436
      %v958 = vpop.permute.xlu0 %957
      %960 = vset.pattern.permute.xlu0 1
      %961 = vperm.xlu0 %960, %v437
      %v962 = vpop.permute.xlu0 %961
      %964 = vset.pattern.permute.xlu0 1
      %965 = vperm.xlu0 %964, %v438
      %v966 = vpop.permute.xlu0 %965
      %968 = vset.pattern.permute.xlu0 1
      %969 = vperm.xlu0 %968, %v439
      %v970 = vpop.permute.xlu0 %969
      %v972 = vadd.f32 %v948, %v958
      %v973 = vadd.f32 %v949, %v958
      %v974 = vadd.f32 %v950, %v962
      %v975 = vadd.f32 %v951, %v962
      %v976 = vadd.f32 %v952, %v966
      %v977 = vadd.f32 %v953, %v966
      %v978 = vadd.f32 %v954, %v970
      %v979 = vadd.f32 %v955, %v970
      %v980 = vld [vmem:[%s6] sm:$0x3]
      %v981 = vpack.c.bf16 %v974, %v972
      %v982 = vpack.c.bf16 %v975, %v973
      %v983 = vpack.c.bf16 %v978, %v976
      %v984 = vpack.c.bf16 %v979, %v977
      %985 = vset.pattern.permute.xlu0 2
      %986 = vperm.xlu0 %985, %v436
      %v987 = vpop.permute.xlu0 %986
      %v990 = vsel %vm648, %v980, 0
      %992 = vmatprep.subr.bf16.mxu0 %v982
      %993 = vmatpush1.bf16.msra.mxu0 %v981
      %994 = vmatprep.subr.bf16.mxu0 %v984
      %995 = vmatpush1.bf16.msra.mxu0 %v983
      %996 = vmatprep.subr.bf16.mxu0 0
      %997 = vmatpush1.bf16.msra.mxu0 0
      %998 = vmatprep.subr.bf16.mxu0 0
      %999 = vmatpush1.bf16.msra.mxu0 0
      %1000 = vmatprep.subr.bf16.mxu0 0
      %1001 = vmatpush1.bf16.msra.mxu0 0
      %1002 = vmatprep.subr.bf16.mxu0 0
      %1003 = vmatpush1.bf16.msra.mxu0 0
      %1004 = vmatprep.subr.bf16.mxu0 0
      %1005 = vmatpush1.bf16.msra.mxu0 0
      %1006 = vmatprep.subr.bf16.mxu0 0
      %1007 = vmatpush1.bf16.msra.mxu0 0
      %1008 = vmatprep.subr.bf16.mxu0 0
      %1009 = vmatpush1.bf16.msra.mxu0 0
      %1010 = vmatprep.subr.bf16.mxu0 0
      %1011 = vmatpush1.bf16.msra.mxu0 0
      %1012 = vmatprep.subr.bf16.mxu0 0
      %1013 = vmatpush1.bf16.msra.mxu0 0
      %1014 = vmatprep.subr.bf16.mxu0 0
      %1015 = vmatpush1.bf16.msra.mxu0 0
      %1016 = vmatprep.subr.bf16.mxu0 0
      %1017 = vmatpush1.bf16.msra.mxu0 0
      %1018 = vmatprep.subr.bf16.mxu0 0
      %1019 = vmatpush1.bf16.msra.mxu0 0
      %1020 = vmatprep.subr.bf16.mxu0 0
      %1021 = vmatpush1.bf16.msra.mxu0 0
      %1022 = vmatprep.subr.bf16.mxu0 0
      %1023 = vmatpush1.bf16.msra.mxu0 0
      %1024 = vmatprep.mubr.bf16.mxu0 0
      %1025 = vmatmul.mubr.bf16.gmra.mrb[0].mxu0 %v990
      %v1026 = vpop.f32.mrb[0].mxu0
      %v1027 = vadd.f32 %v987, %v1026
      %v1028 = vpop.f32.mrb[0].mxu0
      %v1029 = vadd.f32 %v987, %v1028
      %v1030 = vpop.f32.mrb[0].mxu0
      %v1031 = vpop.f32.mrb[0].mxu0
      %1032 = vdwg.mxu0
      %v1035 = vcombine.low %v1027, %v1029
      %1037 = vst [vmem:[%s427] sm:$0xff] %v1035
      %s1038 = smul.u32 2, %s25
      %p1039 = scmp.lt.s32.totalorder %s24, 1
      %s1040 = scalar_select %p1039, %s24, 1
      %p1041 = scmp.lt.s32.totalorder %s1038, 1
      %s1042 = scalar_select %p1041, %s1038, 1
      %s1043 = smul.addr %s1040, 2
      %s1044 = sadd.s32 %s1042, %s1043
      %s1045 = smul.addr %s1044, 4
      %s1046 = scalar_lea.vmem %s9, %s1045
      // Predicated region
      $region57: #{_forward.1} parent=55 // pred_check
        %p1047 = pneg %p263
      $region58: #{_forward.1} parent=55 // pred_check_branch
        %1049 = sbr.rel (%p1047) target = $region60
      $region59: #{_forward.1} parent=55 // pred_region
        %s1050 = smul.u32 2, %s25
      $region60: #{_forward.1} parent=55 // pred_fallthru
        _
    $region56: #{_forward.1} parent=5 // pred_fallthru
      _
    %p1051 = scmp.le.s32.totalorder 2, %s15
    // Predicated region
    $region61: #{_forward.1} parent=5 // pred_check
      %p1052 = pneg %p1051
    $region62: #{_forward.1} parent=5 // pred_check_branch
      %1054 = sbr.rel (%p1052) target = $region64
    $region63: #{_forward.1} parent=5 // pred_region
      %s1055 = ssub.s32 %s15, 2
      // Predicated region
      $region65: #{_forward.1} parent=63 // pred_check
        %p1056 = pneg %p269
      $region66: #{_forward.1} parent=63 // pred_check_branch
        %1058 = sbr.rel (%p1056) target = $region68
      $region67: #{_forward.1} parent=63 // pred_region
        %s1059 = smul.u32 2, %s27
        %p1060 = scmp.lt.s32.totalorder %s26, 1
        %s1061 = scalar_select %p1060, %s26, 1
        %p1062 = scmp.lt.s32.totalorder %s1059, 1
        %s1063 = scalar_select %p1062, %s1059, 1
        %s1064 = smul.addr %s1061, 2
        %s1065 = sadd.s32 %s1063, %s1064
        %s1066 = smul.addr %s1065, 4
        %s1067 = scalar_lea.vmem %s9, %s1066
      $region68: #{_forward.1} parent=63 // pred_fallthru
        _
    $region64: #{_forward.1} parent=5 // pred_fallthru
      _
  $region6: #{_forward.1} parent=0 // loop_footer
    %s19 = sadd.s32 1, %s15
  $region7: #{_forward.1} parent=0 // loop_footer_branch
    %14 = sbr.rel target = $region3
  $region8: #{_forward.1} parent=0 // loop_exit
    _

</llo_original>
